<compile_context>
chip_gen: v5e
topology: v5e:2x2
jax: 0.10.0
libtpu: 0.0.40
codegen_flags: <defaults>
</compile_context>

<pallas_src>
import functools

import jax
import jax.numpy as jnp
from jax import lax
from jax.experimental import pallas as pl
from jax.experimental.pallas import tpu as pltpu


def _round_up(x, m):
    return (x + m - 1) // m * m


def _backbone_head_kernel(x_ref, wconv_ref, mask_ref, wfc_ref, bfc_ref, out_ref,
                          *, H, W, Wp):
    """One batch element: conv3x3 (9 accumulated matmuls) + ReLU + GAP + FC + sigmoid.

    x_ref:     (Lext, Cin)  bf16  padded image, spatial dims flattened row-major (row width Wp)
    wconv_ref: (9, Cin, Fp) bf16  3x3 conv weights, tap-major, zero-padded to Fp lanes
    mask_ref:  (H*Wp, 1)    f32   1/(H*W) at valid spatial rows, 0 at the Wp-W slack columns
    wfc_ref:   (Fp, Cp)     bf16  classifier weight, zero padded
    bfc_ref:   (1, Cp)      f32   classifier bias, zero padded
    out_ref:   (1, Cp)      f32   sigmoid(logits) for this batch row
    """
    M = H * Wp
    Fp = wconv_ref.shape[-1]

    # --- conv3x3 as 9 accumulated MXU matmuls over static row-shifted slices ---
    feat = jnp.zeros((M, Fp), jnp.float32)
    for t in range(9):
        dy, dx = t // 3, t % 3
        off = dy * Wp + dx                                  # static offset
        tap = x_ref[off:off + M, :]                         # (M, Cin) bf16, VMEM slice
        feat += jnp.dot(tap, wconv_ref[t],
                        preferred_element_type=jnp.float32)  # bf16 x bf16 -> f32 acc
    feat = jnp.maximum(feat, 0.0)                            # ReLU (VPU)

    # --- global average pooling: masked sublane reduction (XLU), scale folded in ---
    pooled = jnp.sum(feat * mask_ref[...], axis=0, keepdims=True)   # (1, Fp) f32

    # --- classifier head: Dropout(eval)=identity, Linear (+bias), Sigmoid ---
    logits = jnp.dot(pooled.astype(jnp.bfloat16), wfc_ref[...],
                     preferred_element_type=jnp.float32) + bfc_ref[...]
    out_ref[...] = jax.nn.sigmoid(logits)                    # EUP exp, f32, lane-dense store


def get_model_forward(x_nchw, conv_w, fc_w, fc_b):
    """Forward pass matching GetModel.forward semantics (inference mode).

    x_nchw : (B, Cin, H, W) float32
    conv_w : (3, 3, Cin, F) float32   synthetic backbone conv
    fc_w   : (F, n_classes) float32   classifier Linear weight (already transposed)
    fc_b   : (n_classes,)   float32   classifier Linear bias
    returns: (B, n_classes) float32   sigmoid probabilities
    """
    B, Cin, H, W = x_nchw.shape
    F = conv_w.shape[-1]
    n_classes = fc_w.shape[-1]

    Wp = W + 2                      # padded row width
    Lext = (H + 3) * Wp             # 1 top pad row, 2 bottom pad rows (slack for edge taps)
    M = H * Wp                      # conv output rows per image (incl. masked slack cols)
    Fp = _round_up(F, 128)          # lane-dense feature width
    Cp = _round_up(n_classes, 128)  # lane-dense class width

    # --- glue: NCHW -> NHWC, zero-pad, flatten spatial row-major, cast bf16 (1x HBM traffic) ---
    x = jnp.transpose(x_nchw, (0, 2, 3, 1))                         # NHWC
    xp = jnp.pad(x, ((0, 0), (1, 2), (1, 1), (0, 0)))               # (B, H+3, W+2, Cin)
    x_flat = xp.reshape(B, Lext, Cin).astype(jnp.bfloat16)

    # conv weights: (3,3,Cin,F) -> (9, Cin, Fp), zero padded on feature lanes, bf16
    wconv = jnp.zeros((9, Cin, Fp), jnp.bfloat16)
    wconv = wconv.at[:, :, :F].set(conv_w.reshape(9, Cin, F).astype(jnp.bfloat16))

    # classifier weight/bias zero-padded to lane-dense shapes
    wfc = jnp.zeros((Fp, Cp), jnp.bfloat16).at[:F, :n_classes].set(fc_w.astype(jnp.bfloat16))
    bfc = jnp.zeros((1, Cp), jnp.float32).at[0, :n_classes].set(fc_b.astype(jnp.float32))

    # pooling mask-and-scale: 1/(H*W) on valid columns (x < W), 0 on the 2 slack columns per row
    col = jnp.arange(M, dtype=jnp.int32) % Wp
    mask = jnp.where(col < W, 1.0 / (H * W), 0.0).astype(jnp.float32).reshape(M, 1)

    kernel = functools.partial(_backbone_head_kernel, H=H, W=W, Wp=Wp)

    out = pl.pallas_call(
        kernel,
        out_shape=jax.ShapeDtypeStruct((B, 1, Cp), jnp.float32),
        grid=(B,),
        in_specs=[
            pl.BlockSpec((None, Lext, Cin), lambda b: (b, 0, 0)),   # per-batch image
            pl.BlockSpec((9, Cin, Fp), lambda b: (0, 0, 0)),        # conv weights (resident)
            pl.BlockSpec((M, 1), lambda b: (0, 0)),                 # pooling mask (resident)
            pl.BlockSpec((Fp, Cp), lambda b: (0, 0)),               # fc weight (resident)
            pl.BlockSpec((1, Cp), lambda b: (0, 0)),                # fc bias (resident)
        ],
        out_specs=pl.BlockSpec((None, 1, Cp), lambda b: (b, 0, 0)), # lane-dense (1,128) store
        compiler_params=pltpu.CompilerParams(
            dimension_semantics=("parallel",)),
    )(x_flat, wconv, mask, wfc, bfc)

    return out[:, 0, :n_classes]


if __name__ == "__main__":
    # Small shapes consistent with the module's forward (image classifier), NCHW like PyTorch.
    B, Cin, H, W = 2, 4, 16, 16
    F = 64                           # synthetic backbone feature channels
    n_classes = 8

    key = jax.random.PRNGKey(0)
    kx, kc, kw, kb = jax.random.split(key, 4)
    x = jax.random.normal(kx, (B, Cin, H, W), jnp.float32)
    conv_w = jax.random.normal(kc, (3, 3, Cin, F), jnp.float32) * 0.1
    fc_w = jax.random.normal(kw, (F, n_classes), jnp.float32) * 0.1
    fc_b = jax.random.normal(kb, (n_classes,), jnp.float32) * 0.1

    out = jax.block_until_ready(get_model_forward(x, conv_w, fc_w, fc_b))

    # Pure-JAX reference emulating the same math (bf16 operands, f32 accumulation):
    # conv3x3 (SAME, pad 1) -> ReLU -> global average pool -> linear + bias -> sigmoid.
    xb = jnp.transpose(x, (0, 2, 3, 1)).astype(jnp.bfloat16).astype(jnp.float32)
    wb = conv_w.astype(jnp.bfloat16).astype(jnp.float32)
    xpad = jnp.pad(xb, ((0, 0), (1, 1), (1, 1), (0, 0)))
    feat_ref = jnp.zeros((B, H, W, F), jnp.float32)
    for dy in range(3):
        for dx in range(3):
            feat_ref = feat_ref + jnp.einsum(
                "bhwc,cf->bhwf", xpad[:, dy:dy + H, dx:dx + W, :], wb[dy, dx],
                precision=lax.Precision.HIGHEST)
    feat_ref = jnp.maximum(feat_ref, 0.0)
    pooled_ref = feat_ref.mean(axis=(1, 2))
    pooled_b = pooled_ref.astype(jnp.bfloat16).astype(jnp.float32)
    wfc_b = fc_w.astype(jnp.bfloat16).astype(jnp.float32)
    ref = jax.nn.sigmoid(
        jnp.dot(pooled_b, wfc_b, precision=lax.Precision.HIGHEST) + fc_b)

    assert out.shape == (B, n_classes)
    assert jnp.allclose(out, ref, atol=1e-3, rtol=1e-3), "mismatch vs reference"
    print("KERNEL_OK")
</pallas_src>

<mosaic_0001>
module attributes {stable_mosaic.version = 11 : i64} {
  func.func @_backbone_head_kernel(%arg0: i32, %arg1: memref<1x342x4xbf16, #tpu.memory_space<vmem>>, %arg2: memref<9x4x128xbf16, #tpu.memory_space<vmem>>, %arg3: memref<288x1xf32, #tpu.memory_space<vmem>>, %arg4: memref<128x128xbf16, #tpu.memory_space<vmem>>, %arg5: memref<1x128xf32, #tpu.memory_space<vmem>>, %arg6: memref<1x1x128xf32, #tpu.memory_space<vmem>>) attributes {dimension_semantics = [#tpu.dimension_semantics<parallel>], iteration_bounds = array<i64: 2>, scalar_prefetch = 0 : i64, scratch_operands = 0 : i64, tpu.core_type = #tpu.core_type<tc>, window_params = [{transform_indices = @transform_0, window_bounds = array<i64: 1, 342, 4>}, {pipeline_mode = #tpu.pipeline_mode<synchronous>, transform_indices = @transform_1, window_bounds = array<i64: 9, 4, 128>}, {pipeline_mode = #tpu.pipeline_mode<synchronous>, transform_indices = @transform_2, window_bounds = array<i64: 288, 1>}, {pipeline_mode = #tpu.pipeline_mode<synchronous>, transform_indices = @transform_3, window_bounds = array<i64: 128, 128>}, {pipeline_mode = #tpu.pipeline_mode<synchronous>, transform_indices = @transform_4, window_bounds = array<i64: 1, 128>}, {transform_indices = @transform_5, window_bounds = array<i64: 1, 1, 128>}]} {
    %cst = arith.constant 0.000000e+00 : f32
    %0 = vector.broadcast %cst : f32 to vector<288x128xf32>
    %c0 = arith.constant 0 : index
    %c0_0 = arith.constant 0 : index
    %c0_1 = arith.constant 0 : index
    %1 = vector.load %arg1[%c0, %c0_0, %c0_1] : memref<1x342x4xbf16, #tpu.memory_space<vmem>>, vector<1x288x4xbf16>
    %2 = vector.shape_cast %1 : vector<1x288x4xbf16> to vector<288x4xbf16>
    %c0_2 = arith.constant 0 : index
    %c0_3 = arith.constant 0 : index
    %c0_4 = arith.constant 0 : index
    %3 = vector.load %arg2[%c0_2, %c0_3, %c0_4] : memref<9x4x128xbf16, #tpu.memory_space<vmem>>, vector<1x4x128xbf16>
    %4 = vector.shape_cast %3 : vector<1x4x128xbf16> to vector<4x128xbf16>
    %cst_5 = arith.constant dense<0.000000e+00> : vector<288x128xf32>
    %5 = tpu.matmul %2, %4, %cst_5 {dimension_numbers = #tpu.dot_dimension_numbers<[1], [0], [0], [1], [0, 0, 1, 1], [], []>} : vector<288x4xbf16>, vector<4x128xbf16>, vector<288x128xf32> -> vector<288x128xf32>
    %6 = arith.addf %0, %5 : vector<288x128xf32>
    %c0_6 = arith.constant 0 : index
    %c1 = arith.constant 1 : index
    %c0_7 = arith.constant 0 : index
    %7 = vector.load %arg1[%c0_6, %c1, %c0_7] : memref<1x342x4xbf16, #tpu.memory_space<vmem>>, vector<1x288x4xbf16>
    %8 = vector.shape_cast %7 : vector<1x288x4xbf16> to vector<288x4xbf16>
    %c1_8 = arith.constant 1 : index
    %c0_9 = arith.constant 0 : index
    %c0_10 = arith.constant 0 : index
    %9 = vector.load %arg2[%c1_8, %c0_9, %c0_10] : memref<9x4x128xbf16, #tpu.memory_space<vmem>>, vector<1x4x128xbf16>
    %10 = vector.shape_cast %9 : vector<1x4x128xbf16> to vector<4x128xbf16>
    %cst_11 = arith.constant dense<0.000000e+00> : vector<288x128xf32>
    %11 = tpu.matmul %8, %10, %cst_11 {dimension_numbers = #tpu.dot_dimension_numbers<[1], [0], [0], [1], [0, 0, 1, 1], [], []>} : vector<288x4xbf16>, vector<4x128xbf16>, vector<288x128xf32> -> vector<288x128xf32>
    %12 = arith.addf %6, %11 : vector<288x128xf32>
    %c0_12 = arith.constant 0 : index
    %c2 = arith.constant 2 : index
    %c0_13 = arith.constant 0 : index
    %13 = vector.load %arg1[%c0_12, %c2, %c0_13] : memref<1x342x4xbf16, #tpu.memory_space<vmem>>, vector<1x288x4xbf16>
    %14 = vector.shape_cast %13 : vector<1x288x4xbf16> to vector<288x4xbf16>
    %c2_14 = arith.constant 2 : index
    %c0_15 = arith.constant 0 : index
    %c0_16 = arith.constant 0 : index
    %15 = vector.load %arg2[%c2_14, %c0_15, %c0_16] : memref<9x4x128xbf16, #tpu.memory_space<vmem>>, vector<1x4x128xbf16>
    %16 = vector.shape_cast %15 : vector<1x4x128xbf16> to vector<4x128xbf16>
    %cst_17 = arith.constant dense<0.000000e+00> : vector<288x128xf32>
    %17 = tpu.matmul %14, %16, %cst_17 {dimension_numbers = #tpu.dot_dimension_numbers<[1], [0], [0], [1], [0, 0, 1, 1], [], []>} : vector<288x4xbf16>, vector<4x128xbf16>, vector<288x128xf32> -> vector<288x128xf32>
    %18 = arith.addf %12, %17 : vector<288x128xf32>
    %c0_18 = arith.constant 0 : index
    %c18 = arith.constant 18 : index
    %c0_19 = arith.constant 0 : index
    %19 = vector.load %arg1[%c0_18, %c18, %c0_19] : memref<1x342x4xbf16, #tpu.memory_space<vmem>>, vector<1x288x4xbf16>
    %20 = vector.shape_cast %19 : vector<1x288x4xbf16> to vector<288x4xbf16>
    %c3 = arith.constant 3 : index
    %c0_20 = arith.constant 0 : index
    %c0_21 = arith.constant 0 : index
    %21 = vector.load %arg2[%c3, %c0_20, %c0_21] : memref<9x4x128xbf16, #tpu.memory_space<vmem>>, vector<1x4x128xbf16>
    %22 = vector.shape_cast %21 : vector<1x4x128xbf16> to vector<4x128xbf16>
    %cst_22 = arith.constant dense<0.000000e+00> : vector<288x128xf32>
    %23 = tpu.matmul %20, %22, %cst_22 {dimension_numbers = #tpu.dot_dimension_numbers<[1], [0], [0], [1], [0, 0, 1, 1], [], []>} : vector<288x4xbf16>, vector<4x128xbf16>, vector<288x128xf32> -> vector<288x128xf32>
    %24 = arith.addf %18, %23 : vector<288x128xf32>
    %c0_23 = arith.constant 0 : index
    %c19 = arith.constant 19 : index
    %c0_24 = arith.constant 0 : index
    %25 = vector.load %arg1[%c0_23, %c19, %c0_24] : memref<1x342x4xbf16, #tpu.memory_space<vmem>>, vector<1x288x4xbf16>
    %26 = vector.shape_cast %25 : vector<1x288x4xbf16> to vector<288x4xbf16>
    %c4 = arith.constant 4 : index
    %c0_25 = arith.constant 0 : index
    %c0_26 = arith.constant 0 : index
    %27 = vector.load %arg2[%c4, %c0_25, %c0_26] : memref<9x4x128xbf16, #tpu.memory_space<vmem>>, vector<1x4x128xbf16>
    %28 = vector.shape_cast %27 : vector<1x4x128xbf16> to vector<4x128xbf16>
    %cst_27 = arith.constant dense<0.000000e+00> : vector<288x128xf32>
    %29 = tpu.matmul %26, %28, %cst_27 {dimension_numbers = #tpu.dot_dimension_numbers<[1], [0], [0], [1], [0, 0, 1, 1], [], []>} : vector<288x4xbf16>, vector<4x128xbf16>, vector<288x128xf32> -> vector<288x128xf32>
    %30 = arith.addf %24, %29 : vector<288x128xf32>
    %c0_28 = arith.constant 0 : index
    %c20 = arith.constant 20 : index
    %c0_29 = arith.constant 0 : index
    %31 = vector.load %arg1[%c0_28, %c20, %c0_29] : memref<1x342x4xbf16, #tpu.memory_space<vmem>>, vector<1x288x4xbf16>
    %32 = vector.shape_cast %31 : vector<1x288x4xbf16> to vector<288x4xbf16>
    %c5 = arith.constant 5 : index
    %c0_30 = arith.constant 0 : index
    %c0_31 = arith.constant 0 : index
    %33 = vector.load %arg2[%c5, %c0_30, %c0_31] : memref<9x4x128xbf16, #tpu.memory_space<vmem>>, vector<1x4x128xbf16>
    %34 = vector.shape_cast %33 : vector<1x4x128xbf16> to vector<4x128xbf16>
    %cst_32 = arith.constant dense<0.000000e+00> : vector<288x128xf32>
    %35 = tpu.matmul %32, %34, %cst_32 {dimension_numbers = #tpu.dot_dimension_numbers<[1], [0], [0], [1], [0, 0, 1, 1], [], []>} : vector<288x4xbf16>, vector<4x128xbf16>, vector<288x128xf32> -> vector<288x128xf32>
    %36 = arith.addf %30, %35 : vector<288x128xf32>
    %c0_33 = arith.constant 0 : index
    %c36 = arith.constant 36 : index
    %c0_34 = arith.constant 0 : index
    %37 = vector.load %arg1[%c0_33, %c36, %c0_34] : memref<1x342x4xbf16, #tpu.memory_space<vmem>>, vector<1x288x4xbf16>
    %38 = vector.shape_cast %37 : vector<1x288x4xbf16> to vector<288x4xbf16>
    %c6 = arith.constant 6 : index
    %c0_35 = arith.constant 0 : index
    %c0_36 = arith.constant 0 : index
    %39 = vector.load %arg2[%c6, %c0_35, %c0_36] : memref<9x4x128xbf16, #tpu.memory_space<vmem>>, vector<1x4x128xbf16>
    %40 = vector.shape_cast %39 : vector<1x4x128xbf16> to vector<4x128xbf16>
    %cst_37 = arith.constant dense<0.000000e+00> : vector<288x128xf32>
    %41 = tpu.matmul %38, %40, %cst_37 {dimension_numbers = #tpu.dot_dimension_numbers<[1], [0], [0], [1], [0, 0, 1, 1], [], []>} : vector<288x4xbf16>, vector<4x128xbf16>, vector<288x128xf32> -> vector<288x128xf32>
    %42 = arith.addf %36, %41 : vector<288x128xf32>
    %c0_38 = arith.constant 0 : index
    %c37 = arith.constant 37 : index
    %c0_39 = arith.constant 0 : index
    %43 = vector.load %arg1[%c0_38, %c37, %c0_39] : memref<1x342x4xbf16, #tpu.memory_space<vmem>>, vector<1x288x4xbf16>
    %44 = vector.shape_cast %43 : vector<1x288x4xbf16> to vector<288x4xbf16>
    %c7 = arith.constant 7 : index
    %c0_40 = arith.constant 0 : index
    %c0_41 = arith.constant 0 : index
    %45 = vector.load %arg2[%c7, %c0_40, %c0_41] : memref<9x4x128xbf16, #tpu.memory_space<vmem>>, vector<1x4x128xbf16>
    %46 = vector.shape_cast %45 : vector<1x4x128xbf16> to vector<4x128xbf16>
    %cst_42 = arith.constant dense<0.000000e+00> : vector<288x128xf32>
    %47 = tpu.matmul %44, %46, %cst_42 {dimension_numbers = #tpu.dot_dimension_numbers<[1], [0], [0], [1], [0, 0, 1, 1], [], []>} : vector<288x4xbf16>, vector<4x128xbf16>, vector<288x128xf32> -> vector<288x128xf32>
    %48 = arith.addf %42, %47 : vector<288x128xf32>
    %c0_43 = arith.constant 0 : index
    %c38 = arith.constant 38 : index
    %c0_44 = arith.constant 0 : index
    %49 = vector.load %arg1[%c0_43, %c38, %c0_44] : memref<1x342x4xbf16, #tpu.memory_space<vmem>>, vector<1x288x4xbf16>
    %50 = vector.shape_cast %49 : vector<1x288x4xbf16> to vector<288x4xbf16>
    %c8 = arith.constant 8 : index
    %c0_45 = arith.constant 0 : index
    %c0_46 = arith.constant 0 : index
    %51 = vector.load %arg2[%c8, %c0_45, %c0_46] : memref<9x4x128xbf16, #tpu.memory_space<vmem>>, vector<1x4x128xbf16>
    %52 = vector.shape_cast %51 : vector<1x4x128xbf16> to vector<4x128xbf16>
    %cst_47 = arith.constant dense<0.000000e+00> : vector<288x128xf32>
    %53 = tpu.matmul %50, %52, %cst_47 {dimension_numbers = #tpu.dot_dimension_numbers<[1], [0], [0], [1], [0, 0, 1, 1], [], []>} : vector<288x4xbf16>, vector<4x128xbf16>, vector<288x128xf32> -> vector<288x128xf32>
    %54 = arith.addf %48, %53 : vector<288x128xf32>
    %cst_48 = arith.constant 0.000000e+00 : f32
    %55 = vector.broadcast %cst_48 : f32 to vector<288x128xf32>
    %56 = arith.maximumf %54, %55 : vector<288x128xf32>
    %c0_49 = arith.constant 0 : index
    %c0_50 = arith.constant 0 : index
    %57 = vector.load %arg3[%c0_49, %c0_50] : memref<288x1xf32, #tpu.memory_space<vmem>>, vector<288x1xf32>
    %58 = vector.broadcast %57 : vector<288x1xf32> to vector<288x128xf32>
    %59 = arith.mulf %56, %58 : vector<288x128xf32>
    %cst_51 = arith.constant dense<0.000000e+00> : vector<128xf32>
    %60 = vector.multi_reduction <add>, %59, %cst_51 [0] : vector<288x128xf32> to vector<128xf32>
    %61 = vector.shape_cast %60 : vector<128xf32> to vector<1x128xf32>
    %62 = arith.truncf %61 : vector<1x128xf32> to vector<1x128xbf16>
    %c0_52 = arith.constant 0 : index
    %c0_53 = arith.constant 0 : index
    %63 = vector.load %arg4[%c0_52, %c0_53] : memref<128x128xbf16, #tpu.memory_space<vmem>>, vector<128x128xbf16>
    %cst_54 = arith.constant dense<0.000000e+00> : vector<1x128xf32>
    %64 = tpu.matmul %62, %63, %cst_54 {dimension_numbers = #tpu.dot_dimension_numbers<[1], [0], [0], [1], [0, 0, 1, 1], [], []>} : vector<1x128xbf16>, vector<128x128xbf16>, vector<1x128xf32> -> vector<1x128xf32>
    %c0_55 = arith.constant 0 : index
    %c0_56 = arith.constant 0 : index
    %65 = vector.load %arg5[%c0_55, %c0_56] : memref<1x128xf32, #tpu.memory_space<vmem>>, vector<1x128xf32>
    %66 = arith.addf %64, %65 : vector<1x128xf32>
    %67 = arith.negf %66 : vector<1x128xf32>
    %68 = math.exp %67 : vector<1x128xf32>
    %cst_57 = arith.constant 1.000000e+00 : f32
    %69 = vector.broadcast %cst_57 : f32 to vector<1x128xf32>
    %70 = arith.addf %69, %68 : vector<1x128xf32>
    %71 = arith.divf %69, %70 : vector<1x128xf32>
    %c0_58 = arith.constant 0 : index
    %c0_59 = arith.constant 0 : index
    %c0_60 = arith.constant 0 : index
    %72 = vector.load %arg6[%c0_58, %c0_59, %c0_60] : memref<1x1x128xf32, #tpu.memory_space<vmem>>, vector<1x1x128xf32>
    %73 = vector.shape_cast %72 : vector<1x1x128xf32> to vector<1x128xf32>
    %74 = vector.shape_cast %71 : vector<1x128xf32> to vector<1x1x128xf32>
    tpu.vector_store %arg6[%c0_58, %c0_59, %c0_60], %74 {strides = array<i32>} : memref<1x1x128xf32, #tpu.memory_space<vmem>>, vector<1x1x128xf32>,
    return
  }
  func.func @transform_0(%arg0: i32) -> (i32, i32, i32) {
    %c0_i32 = arith.constant 0 : i32
    %c0_i32_0 = arith.constant 0 : i32
    %c0_i32_1 = arith.constant 0 : i32
    return %arg0, %c0_i32, %c0_i32_0 : i32, i32, i32
  }
  func.func @transform_1(%arg0: i32) -> (i32, i32, i32) {
    %c0_i32 = arith.constant 0 : i32
    %c0_i32_0 = arith.constant 0 : i32
    %c0_i32_1 = arith.constant 0 : i32
    %c0_i32_2 = arith.constant 0 : i32
    return %c0_i32, %c0_i32_0, %c0_i32_1 : i32, i32, i32
  }
  func.func @transform_2(%arg0: i32) -> (i32, i32) {
    %c0_i32 = arith.constant 0 : i32
    %c0_i32_0 = arith.constant 0 : i32
    %c0_i32_1 = arith.constant 0 : i32
    return %c0_i32, %c0_i32_0 : i32, i32
  }
  func.func @transform_3(%arg0: i32) -> (i32, i32) {
    %c0_i32 = arith.constant 0 : i32
    %c0_i32_0 = arith.constant 0 : i32
    %c0_i32_1 = arith.constant 0 : i32
    return %c0_i32, %c0_i32_0 : i32, i32
  }
  func.func @transform_4(%arg0: i32) -> (i32, i32) {
    %c0_i32 = arith.constant 0 : i32
    %c0_i32_0 = arith.constant 0 : i32
    %c0_i32_1 = arith.constant 0 : i32
    return %c0_i32, %c0_i32_0 : i32, i32
  }
  func.func @transform_5(%arg0: i32) -> (i32, i32, i32) {
    %c0_i32 = arith.constant 0 : i32
    %c0_i32_0 = arith.constant 0 : i32
    %c0_i32_1 = arith.constant 0 : i32
    return %arg0, %c0_i32, %c0_i32_0 : i32, i32, i32
  }
}

</mosaic_0001>

<llo_original>
// kernel: tpu_custom_call.1
$region0: #{tpu_custom_call.1}
  #allocation0 [shape = 'u32[]', space=smem, size = 0x4, offset = 0x4, fixed_abs, tag = 'smem constant byte address 0x4 - core index']
  #allocation1 [shape = 'u32[72,128]{1,0:T(1,128)}', space=vmem, size = 0x9000, scoped, tag = 'internal scratch']
  %s0 = inlined_call_operand.vmem [shape: bf16[2,342,4], index: 0, kind: input, shape index: {}]
  %s1 = inlined_call_operand.vmem [shape: bf16[9,4,128], index: 1, kind: input, shape index: {}]
  %s2 = inlined_call_operand.vmem [shape: f32[288,1], index: 2, kind: input, shape index: {}]
  %s3 = inlined_call_operand.vmem [shape: bf16[128,128], index: 3, kind: input, shape index: {}]
  %s4 = inlined_call_operand.vmem [shape: f32[1,128], index: 4, kind: input, shape index: {}]
  %s5 = inlined_call_operand.hbm [shape: f32[2,1,128], index: 5, kind: output, shape index: {}]
  %s6 = sld [smem:[#allocation0]]
  $region53: #{tpu_custom_call.1} parent=0
    _
  %s8 = ssub.s32 1, %s6
  %s9 = scalar_select 0, %s8, %s6
  $region1: #{tpu_custom_call.1} parent=0
    #allocation2 [shape = 'u8[1024]{0}', space=vmem, size = 0x400, scoped, tag = 'output window, operand 0']
    #allocation3 [shape = 's32[2]{0}', space=sflag, size = 0x8, scoped, tag = 'scoped memory for tpu_custom_call.1']
    %10 = vsyncpa [#allocation3], 0
    %s11 = scalar_lea.sflag [#allocation3], 1
    %12 = vsyncpa %s11, 0
    loop: start=0, step=1, limit=4
    $region2: #{tpu_custom_call.1} parent=1 // loop_pre_header
      _
    $region3: #{tpu_custom_call.1} parent=1 // loop_header
      %s14 = sphi 0, %s18
      %p15 = scmp.ge.s32.totalorder %s14, 4
      %s24 = sphi 0, %s26
      %s27 = sphi 0, %s24
      %s28 = sphi 0, %s27
      %s44 = sphi 0, %s28
      %s48 = sphi 0, %s48
      %s50 = sphi 0, %s48
      %s51 = sphi 0, %s50
      %s65 = sphi 0, %s51
      %s69 = sphi 0, %s69
      %s71 = sphi 0, %s69
      %s72 = sphi 0, %s71
      %s86 = sphi 0, %s72
      %s90 = sphi 0, %s90
      %s92 = sphi 0, %s90
      %s93 = sphi 0, %s92
      %s107 = sphi 0, %s93
      %s111 = sphi 0, %s111
      %s113 = sphi 0, %s111
      %s114 = sphi 0, %s113
      %s128 = sphi 0, %s114
      %s134 = sphi 0, %s136
      %s137 = sphi 0, %s134
      %s138 = sphi 0, %s137
      %s154 = sphi 0, %s138
    $region4: #{tpu_custom_call.1} parent=1 // loop_header_branch
      %17 = sbr.rel (%p15) target = $region8
    $region5: #{tpu_custom_call.1} parent=1 // loop_body
      %s19 = ssub.s32 %s14, 1
      %s20 = ssub.s32 %s14, 2
      %s21 = sadd.s32 %s14, 1
      %s22 = ssub.s32 %s14, %s21
      %p23 = scmp.eq.s32.totalorder %s22, 0
      %s25 = sadd.s32 %s24, 1
      %s26 = scalar_select %p23, %s24, %s25
      %p29 = pneg %p23
      %p30 = scmp.eq.s32.totalorder %s14, 1
      %p31 = por %p29, %p30
      %p32 = scmp.ne.s32.totalorder %s24, %s27
      %p33 = scmp.eq.s32.totalorder %s14, 0
      %p34 = por %p32, %p33
      %p35 = scmp.ne.s32.totalorder %s24, %s27
      %p36 = scmp.eq.s32.totalorder %s19, 1
      %p37 = por %p35, %p36
      %p38 = scmp.ne.s32.totalorder %s27, %s28
      %p39 = scmp.eq.s32.totalorder %s19, 0
      %p40 = por %p38, %p39
      %p41 = scmp.ne.s32.totalorder %s27, %s28
      %p42 = scmp.eq.s32.totalorder %s20, 1
      %p43 = por %p41, %p42
      %p45 = scmp.ne.s32.totalorder %s28, %s44
      %p46 = scmp.eq.s32.totalorder %s20, 0
      %p47 = por %p45, %p46
      %s49 = sadd.s32 %s48, 1
      %p52 = scmp.eq.s32.totalorder %s14, 1
      %p53 = scmp.ne.s32.totalorder %s48, %s50
      %p54 = scmp.eq.s32.totalorder %s14, 0
      %p55 = por %p53, %p54
      %p56 = scmp.ne.s32.totalorder %s48, %s50
      %p57 = scmp.eq.s32.totalorder %s19, 1
      %p58 = por %p56, %p57
      %p59 = scmp.ne.s32.totalorder %s50, %s51
      %p60 = scmp.eq.s32.totalorder %s19, 0
      %p61 = por %p59, %p60
      %p62 = scmp.ne.s32.totalorder %s50, %s51
      %p63 = scmp.eq.s32.totalorder %s20, 1
      %p64 = por %p62, %p63
      %p66 = scmp.ne.s32.totalorder %s51, %s65
      %p67 = scmp.eq.s32.totalorder %s20, 0
      %p68 = por %p66, %p67
      %s70 = sadd.s32 %s69, 1
      %p73 = scmp.eq.s32.totalorder %s14, 1
      %p74 = scmp.ne.s32.totalorder %s69, %s71
      %p75 = scmp.eq.s32.totalorder %s14, 0
      %p76 = por %p74, %p75
      %p77 = scmp.ne.s32.totalorder %s69, %s71
      %p78 = scmp.eq.s32.totalorder %s19, 1
      %p79 = por %p77, %p78
      %p80 = scmp.ne.s32.totalorder %s71, %s72
      %p81 = scmp.eq.s32.totalorder %s19, 0
      %p82 = por %p80, %p81
      %p83 = scmp.ne.s32.totalorder %s71, %s72
      %p84 = scmp.eq.s32.totalorder %s20, 1
      %p85 = por %p83, %p84
      %p87 = scmp.ne.s32.totalorder %s72, %s86
      %p88 = scmp.eq.s32.totalorder %s20, 0
      %p89 = por %p87, %p88
      %s91 = sadd.s32 %s90, 1
      %p94 = scmp.eq.s32.totalorder %s14, 1
      %p95 = scmp.ne.s32.totalorder %s90, %s92
      %p96 = scmp.eq.s32.totalorder %s14, 0
      %p97 = por %p95, %p96
      %p98 = scmp.ne.s32.totalorder %s90, %s92
      %p99 = scmp.eq.s32.totalorder %s19, 1
      %p100 = por %p98, %p99
      %p101 = scmp.ne.s32.totalorder %s92, %s93
      %p102 = scmp.eq.s32.totalorder %s19, 0
      %p103 = por %p101, %p102
      %p104 = scmp.ne.s32.totalorder %s92, %s93
      %p105 = scmp.eq.s32.totalorder %s20, 1
      %p106 = por %p104, %p105
      %p108 = scmp.ne.s32.totalorder %s93, %s107
      %p109 = scmp.eq.s32.totalorder %s20, 0
      %p110 = por %p108, %p109
      %s112 = sadd.s32 %s111, 1
      %p115 = scmp.eq.s32.totalorder %s14, 1
      %p116 = scmp.ne.s32.totalorder %s111, %s113
      %p117 = scmp.eq.s32.totalorder %s14, 0
      %p118 = por %p116, %p117
      %p119 = scmp.ne.s32.totalorder %s111, %s113
      %p120 = scmp.eq.s32.totalorder %s19, 1
      %p121 = por %p119, %p120
      %p122 = scmp.ne.s32.totalorder %s113, %s114
      %p123 = scmp.eq.s32.totalorder %s19, 0
      %p124 = por %p122, %p123
      %p125 = scmp.ne.s32.totalorder %s113, %s114
      %p126 = scmp.eq.s32.totalorder %s20, 1
      %p127 = por %p125, %p126
      %p129 = scmp.ne.s32.totalorder %s114, %s128
      %p130 = scmp.eq.s32.totalorder %s20, 0
      %p131 = por %p129, %p130
      %s132 = ssub.s32 %s14, %s21
      %p133 = scmp.eq.s32.totalorder %s132, 0
      %s135 = sadd.s32 %s134, 1
      %s136 = scalar_select %p133, %s134, %s135
      %p139 = pneg %p133
      %p140 = scmp.eq.s32.totalorder %s14, 1
      %p141 = por %p139, %p140
      %p142 = scmp.ne.s32.totalorder %s134, %s137
      %p143 = scmp.eq.s32.totalorder %s14, 0
      %p144 = por %p142, %p143
      %p145 = scmp.ne.s32.totalorder %s134, %s137
      %p146 = scmp.eq.s32.totalorder %s19, 1
      %p147 = por %p145, %p146
      %p148 = scmp.ne.s32.totalorder %s137, %s138
      %p149 = scmp.eq.s32.totalorder %s19, 0
      %p150 = por %p148, %p149
      %p151 = scmp.ne.s32.totalorder %s137, %s138
      %p152 = scmp.eq.s32.totalorder %s20, 1
      %p153 = por %p151, %p152
      %p155 = scmp.ne.s32.totalorder %s138, %s154
      %p156 = scmp.eq.s32.totalorder %s20, 0
      %p157 = por %p155, %p156
      %p158 = scmp.le.s32.totalorder 1, %s14
      %p159 = scmp.lt.s32.totalorder %s14, 3
      %p160 = pnand %p158, %p159
      %p161 = pneg %p160
      // Predicated region
      $region9: #{tpu_custom_call.1} parent=5 // pred_check
        _
      $region10: #{tpu_custom_call.1} parent=5 // pred_check_branch
        %163 = sbr.rel (%p160) target = $region12
      $region11: #{tpu_custom_call.1} parent=5 // pred_region
        %s164 = ssub.s32 %s14, 1
        // Predicated region
        $region13: #{tpu_custom_call.1} parent=11 // pred_check
          %p165 = pneg %p61
        $region14: #{tpu_custom_call.1} parent=11 // pred_check_branch
          %167 = sbr.rel (%p165) target = $region16
        $region15: #{tpu_custom_call.1} parent=11 // pred_region
          _
        $region16: #{tpu_custom_call.1} parent=11 // pred_fallthru
          _
        // Predicated region
        $region17: #{tpu_custom_call.1} parent=11 // pred_check
          %p168 = pneg %p82
        $region18: #{tpu_custom_call.1} parent=11 // pred_check_branch
          %170 = sbr.rel (%p168) target = $region20
        $region19: #{tpu_custom_call.1} parent=11 // pred_region
          _
        $region20: #{tpu_custom_call.1} parent=11 // pred_fallthru
          _
        // Predicated region
        $region21: #{tpu_custom_call.1} parent=11 // pred_check
          %p171 = pneg %p103
        $region22: #{tpu_custom_call.1} parent=11 // pred_check_branch
          %173 = sbr.rel (%p171) target = $region24
        $region23: #{tpu_custom_call.1} parent=11 // pred_region
          _
        $region24: #{tpu_custom_call.1} parent=11 // pred_fallthru
          _
        // Predicated region
        $region25: #{tpu_custom_call.1} parent=11 // pred_check
          %p174 = pneg %p124
        $region26: #{tpu_custom_call.1} parent=11 // pred_check_branch
          %176 = sbr.rel (%p174) target = $region28
        $region27: #{tpu_custom_call.1} parent=11 // pred_region
          _
        $region28: #{tpu_custom_call.1} parent=11 // pred_fallthru
          _
      $region12: #{tpu_custom_call.1} parent=5 // pred_fallthru
        _
      %p177 = scmp.lt.s32.totalorder %s14, 2
      // Predicated region
      $region29: #{tpu_custom_call.1} parent=5 // pred_check
        %p178 = pneg %p177
      $region30: #{tpu_custom_call.1} parent=5 // pred_check_branch
        %180 = sbr.rel (%p178) target = $region32
      $region31: #{tpu_custom_call.1} parent=5 // pred_region
        // Predicated region
        $region33: #{tpu_custom_call.1} parent=31 // pred_check
          %p181 = pneg %p34
        $region34: #{tpu_custom_call.1} parent=31 // pred_check_branch
          %183 = sbr.rel (%p181) target = $region36
        $region35: #{tpu_custom_call.1} parent=31 // pred_region
          %p184 = scmp.lt.s32.totalorder %s14, 1
          %s185 = scalar_select %p184, %s14, 1
          %s186 = smul.addr %s185, 43
          %s187 = smul.addr %s186, 4
          %s188 = scalar_lea.vmem %s0, %s187
        $region36: #{tpu_custom_call.1} parent=31 // pred_fallthru
          _
      $region32: #{tpu_custom_call.1} parent=5 // pred_fallthru
        _
      %p189 = scmp.le.s32.totalorder 1, %s14
      %p190 = scmp.lt.s32.totalorder %s14, 3
      %p191 = pnand %p189, %p190
      %p192 = pneg %p191
      // Predicated region
      $region37: #{tpu_custom_call.1} parent=5 // pred_check
        _
      $region38: #{tpu_custom_call.1} parent=5 // pred_check_branch
        %194 = sbr.rel (%p191) target = $region40
      $region39: #{tpu_custom_call.1} parent=5 // pred_region
        %s195 = ssub.s32 %s14, 1
        %p196 = scmp.lt.s32.totalorder %s19, 1
        %s197 = scalar_select %p196, %s19, 1
        %s198 = smul.addr %s197, 43
        %s199 = smul.addr %s198, 4
        %s200 = scalar_lea.vmem %s0, %s199
        %p201 = pneg %p40
        %p202 = pneg %p37
        %p203 = pneg %p61
        %p204 = pneg %p58
        %p205 = pneg %p82
        %p206 = pneg %p79
        %p207 = pneg %p103
        %p208 = pneg %p100
        %p209 = pneg %p124
        %p210 = pneg %p121
        %p211 = pneg %p150
        %p212 = pneg %p147
        %s213 = sand.u32 %s137, 1
        %s214 = scalar_lea.sflag [#allocation3], %s213
        %s215 = sand.u32 %s137, 1
        %s216 = scalar_lea.vmem [#allocation2], %s215
        %p217 = scmp.lt.s32.totalorder %s19, 1
        %s218 = scalar_select %p217, %s19, 1
        %s219 = smul.addr %s218, 43
        %s220 = smul.addr %s219, 4
        %s221 = scalar_lea.vmem %s0, %s220
        %v223 = vld [vmem:[%s221] sm:$0xf]
        %v224 = vld [vmem:[%s221 + $0x4] sm:$0xf]
        %v225 = vld [vmem:[%s221 + $0x8] sm:$0xf]
        %v226 = vld [vmem:[%s221 + $0xc] sm:$0xf]
        %v227 = vld [vmem:[%s221 + $0x10] sm:$0xf]
        %v228 = vld [vmem:[%s221 + $0x14] sm:$0xf]
        %v229 = vld [vmem:[%s221 + $0x18] sm:$0xf]
        %v230 = vld [vmem:[%s221 + $0x1c] sm:$0xf]
        %v231 = vld [vmem:[%s221 + $0x20] sm:$0xf]
        %v232 = vld [vmem:[%s221 + $0x24] sm:$0xf]
        %v233 = vld [vmem:[%s221 + $0x28] sm:$0xf]
        %v234 = vld [vmem:[%s221 + $0x2c] sm:$0xf]
        %v235 = vld [vmem:[%s221 + $0x30] sm:$0xf]
        %v236 = vld [vmem:[%s221 + $0x34] sm:$0xf]
        %v237 = vld [vmem:[%s221 + $0x38] sm:$0xf]
        %v238 = vld [vmem:[%s221 + $0x3c] sm:$0xf]
        %v239 = vld [vmem:[%s221 + $0x40] sm:$0xf]
        %v240 = vld [vmem:[%s221 + $0x44] sm:$0xf]
        %v241 = vld [vmem:[%s221 + $0x48] sm:$0xf]
        %v242 = vld [vmem:[%s221 + $0x4c] sm:$0xf]
        %v243 = vld [vmem:[%s221 + $0x50] sm:$0xf]
        %v244 = vld [vmem:[%s221 + $0x54] sm:$0xf]
        %v245 = vld [vmem:[%s221 + $0x58] sm:$0xf]
        %v246 = vld [vmem:[%s221 + $0x5c] sm:$0xf]
        %v247 = vld [vmem:[%s221 + $0x60] sm:$0xf]
        %v248 = vld [vmem:[%s221 + $0x64] sm:$0xf]
        %v249 = vld [vmem:[%s221 + $0x68] sm:$0xf]
        %v250 = vld [vmem:[%s221 + $0x6c] sm:$0xf]
        %v251 = vld [vmem:[%s221 + $0x70] sm:$0xf]
        %v252 = vld [vmem:[%s221 + $0x74] sm:$0xf]
        %v253 = vld [vmem:[%s221 + $0x78] sm:$0xf]
        %v254 = vld [vmem:[%s221 + $0x7c] sm:$0xf]
        %v255 = vld [vmem:[%s221 + $0x80] sm:$0xf]
        %v256 = vld [vmem:[%s221 + $0x84] sm:$0xf]
        %v257 = vld [vmem:[%s221 + $0x88] sm:$0xf]
        %v258 = vld [vmem:[%s221 + $0x8c] sm:$0xf]
        %v259 = vld [vmem:[%s1] sm:$0x3]
        %v260 = vld [vmem:[%s221 + $0x90] sm:$0x1]
        %s261 = scalar_lea.vmem %s1, 2
        %v262 = vld [vmem:[%s261] sm:$0x3]
        %v300 = vunpack.c.l.b16 %v223
        %v301 = vunpack.c.l.b16 %v224
        %v302 = vunpack.c.l.b16 %v225
        %v303 = vunpack.c.l.b16 %v226
        %v304 = vunpack.c.l.b16 %v227
        %v305 = vunpack.c.l.b16 %v228
        %v306 = vunpack.c.l.b16 %v229
        %v307 = vunpack.c.l.b16 %v230
        %v308 = vunpack.c.l.b16 %v231
        %v309 = vunpack.c.l.b16 %v232
        %v310 = vunpack.c.l.b16 %v233
        %v311 = vunpack.c.l.b16 %v234
        %v312 = vunpack.c.l.b16 %v235
        %v313 = vunpack.c.l.b16 %v236
        %v314 = vunpack.c.l.b16 %v237
        %v315 = vunpack.c.l.b16 %v238
        %v316 = vunpack.c.l.b16 %v239
        %v317 = vunpack.c.l.b16 %v240
        %v318 = vunpack.c.l.b16 %v241
        %v319 = vunpack.c.l.b16 %v242
        %v320 = vunpack.c.l.b16 %v243
        %v321 = vunpack.c.l.b16 %v244
        %v322 = vunpack.c.l.b16 %v245
        %v323 = vunpack.c.l.b16 %v246
        %v324 = vunpack.c.l.b16 %v247
        %v325 = vunpack.c.l.b16 %v248
        %v326 = vunpack.c.l.b16 %v249
        %v327 = vunpack.c.l.b16 %v250
        %v328 = vunpack.c.l.b16 %v251
        %v329 = vunpack.c.l.b16 %v252
        %v330 = vunpack.c.l.b16 %v253
        %v331 = vunpack.c.l.b16 %v254
        %v332 = vunpack.c.l.b16 %v255
        %v333 = vunpack.c.l.b16 %v256
        %v334 = vunpack.c.l.b16 %v257
        %v335 = vunpack.c.l.b16 %v258
        %v336 = vunpack.c.l.b16 %v260
        %v337 = vpack.c.b16 %v301, %v300
        %v338 = vpack.c.b16 %v303, %v302
        %v339 = vpack.c.b16 %v305, %v304
        %v340 = vpack.c.b16 %v307, %v306
        %v341 = vpack.c.b16 %v309, %v308
        %v342 = vpack.c.b16 %v311, %v310
        %v343 = vpack.c.b16 %v313, %v312
        %v344 = vpack.c.b16 %v315, %v314
        %v345 = vpack.c.b16 %v317, %v316
        %v346 = vpack.c.b16 %v319, %v318
        %v347 = vpack.c.b16 %v321, %v320
        %v348 = vpack.c.b16 %v323, %v322
        %v349 = vpack.c.b16 %v325, %v324
        %v350 = vpack.c.b16 %v327, %v326
        %v351 = vpack.c.b16 %v329, %v328
        %v352 = vpack.c.b16 %v331, %v330
        %v353 = vpack.c.b16 %v333, %v332
        %v354 = vpack.c.b16 %v335, %v334
        %v355 = vpack.c.b16 %v336, %v336
        %vm356 = vsmask.f32 7424
        %v358 = vshrl.u32 %v337, 16
        %v360 = vshll.u32 %v337, 16
        %v362 = vrot.slane %v360, 1
        %v363 = vor.u32 %v358, %v362
        %v365 = vshll.u32 %v338, 16
        %v367 = vrot.slane %v365, 1
        %v368 = vsel %vm356, %v363, %v367
        %v369 = vshrl.u32 %v338, 16
        %v371 = vor.u32 %v369, %v367
        %v373 = vshll.u32 %v339, 16
        %v375 = vrot.slane %v373, 1
        %v376 = vsel %vm356, %v371, %v375
        %v377 = vshrl.u32 %v339, 16
        %v379 = vor.u32 %v377, %v375
        %v381 = vshll.u32 %v340, 16
        %v383 = vrot.slane %v381, 1
        %v384 = vsel %vm356, %v379, %v383
        %v385 = vshrl.u32 %v340, 16
        %v387 = vor.u32 %v385, %v383
        %v389 = vshll.u32 %v341, 16
        %v391 = vrot.slane %v389, 1
        %v392 = vsel %vm356, %v387, %v391
        %v393 = vshrl.u32 %v341, 16
        %v395 = vor.u32 %v393, %v391
        %v397 = vshll.u32 %v342, 16
        %v399 = vrot.slane %v397, 1
        %v400 = vsel %vm356, %v395, %v399
        %v401 = vshrl.u32 %v342, 16
        %v403 = vor.u32 %v401, %v399
        %v405 = vshll.u32 %v343, 16
        %v407 = vrot.slane %v405, 1
        %v408 = vsel %vm356, %v403, %v407
        %v409 = vshrl.u32 %v343, 16
        %v411 = vor.u32 %v409, %v407
        %v413 = vshll.u32 %v344, 16
        %v415 = vrot.slane %v413, 1
        %v416 = vsel %vm356, %v411, %v415
        %v417 = vshrl.u32 %v344, 16
        %v419 = vor.u32 %v417, %v415
        %v421 = vshll.u32 %v345, 16
        %v423 = vrot.slane %v421, 1
        %v424 = vsel %vm356, %v419, %v423
        %v425 = vshrl.u32 %v345, 16
        %v427 = vor.u32 %v425, %v423
        %v429 = vshll.u32 %v346, 16
        %v431 = vrot.slane %v429, 1
        %v432 = vsel %vm356, %v427, %v431
        %v433 = vshrl.u32 %v346, 16
        %v435 = vor.u32 %v433, %v431
        %v437 = vshll.u32 %v347, 16
        %v439 = vrot.slane %v437, 1
        %v440 = vsel %vm356, %v435, %v439
        %v441 = vshrl.u32 %v347, 16
        %v443 = vor.u32 %v441, %v439
        %v445 = vshll.u32 %v348, 16
        %v447 = vrot.slane %v445, 1
        %v448 = vsel %vm356, %v443, %v447
        %v449 = vshrl.u32 %v348, 16
        %v451 = vor.u32 %v449, %v447
        %v453 = vshll.u32 %v349, 16
        %v455 = vrot.slane %v453, 1
        %v456 = vsel %vm356, %v451, %v455
        %v457 = vshrl.u32 %v349, 16
        %v459 = vor.u32 %v457, %v455
        %v461 = vshll.u32 %v350, 16
        %v463 = vrot.slane %v461, 1
        %v464 = vsel %vm356, %v459, %v463
        %v465 = vshrl.u32 %v350, 16
        %v467 = vor.u32 %v465, %v463
        %v469 = vshll.u32 %v351, 16
        %v471 = vrot.slane %v469, 1
        %v472 = vsel %vm356, %v467, %v471
        %v473 = vshrl.u32 %v351, 16
        %v475 = vor.u32 %v473, %v471
        %v477 = vshll.u32 %v352, 16
        %v479 = vrot.slane %v477, 1
        %v480 = vsel %vm356, %v475, %v479
        %v481 = vshrl.u32 %v352, 16
        %v483 = vor.u32 %v481, %v479
        %v485 = vshll.u32 %v353, 16
        %v487 = vrot.slane %v485, 1
        %v488 = vsel %vm356, %v483, %v487
        %v489 = vshrl.u32 %v353, 16
        %v491 = vor.u32 %v489, %v487
        %v493 = vshll.u32 %v354, 16
        %v495 = vrot.slane %v493, 1
        %v496 = vsel %vm356, %v491, %v495
        %v497 = vshrl.u32 %v354, 16
        %v499 = vor.u32 %v497, %v495
        %v501 = vshll.u32 %v355, 16
        %v503 = vrot.slane %v501, 1
        %v504 = vsel %vm356, %v499, %v503
        %vm505 = vcmask 31744
        %v507 = vsel %vm505, %v368, 0
        %v510 = vsel %vm505, %v376, 0
        %v513 = vsel %vm505, %v384, 0
        %v516 = vsel %vm505, %v392, 0
        %v519 = vsel %vm505, %v400, 0
        %v522 = vsel %vm505, %v408, 0
        %v525 = vsel %vm505, %v416, 0
        %v528 = vsel %vm505, %v424, 0
        %v531 = vsel %vm505, %v432, 0
        %v534 = vsel %vm505, %v440, 0
        %v537 = vsel %vm505, %v448, 0
        %v540 = vsel %vm505, %v456, 0
        %v543 = vsel %vm505, %v464, 0
        %v546 = vsel %vm505, %v472, 0
        %v549 = vsel %vm505, %v480, 0
        %v552 = vsel %vm505, %v488, 0
        %v555 = vsel %vm505, %v496, 0
        %v558 = vsel %vm505, %v504, 0
        %vm560 = vcmask 1041408
        %v562 = vsel %vm560, %v262, 0
        %564 = vmatpush.bf16.msra.mxu0 0
        %565 = vmatpush.bf16.msra.mxu0 0
        %566 = vmatpush.bf16.msra.mxu0 0
        %567 = vmatpush.bf16.msra.mxu0 0
        %568 = vmatpush.bf16.msra.mxu0 0
        %569 = vmatpush.bf16.msra.mxu0 0
        %570 = vmatpush.bf16.msra.mxu0 0
        %571 = vmatpush.bf16.msra.mxu0 %v562
        %572 = vmatmul.bf16.gmra.mxu0 %v507
        %v573 = vpop.f32.mrf.mxu0
        %v574 = vadd.f32 0.0, %v573
        %v575 = vpop.f32.mrf.mxu0
        %v576 = vadd.f32 0.0, %v575
        %577 = vmatmul.bf16.gmra.mxu0 %v510
        %v578 = vpop.f32.mrf.mxu0
        %v579 = vadd.f32 0.0, %v578
        %v580 = vpop.f32.mrf.mxu0
        %v581 = vadd.f32 0.0, %v580
        %582 = vmatmul.bf16.gmra.mxu0 %v513
        %v583 = vpop.f32.mrf.mxu0
        %v584 = vadd.f32 0.0, %v583
        %v585 = vpop.f32.mrf.mxu0
        %v586 = vadd.f32 0.0, %v585
        %587 = vmatmul.bf16.gmra.mxu0 %v516
        %v588 = vpop.f32.mrf.mxu0
        %v589 = vadd.f32 0.0, %v588
        %v590 = vpop.f32.mrf.mxu0
        %v591 = vadd.f32 0.0, %v590
        %592 = vmatmul.bf16.gmra.mxu0 %v519
        %v593 = vpop.f32.mrf.mxu0
        %v594 = vadd.f32 0.0, %v593
        %v595 = vpop.f32.mrf.mxu0
        %v596 = vadd.f32 0.0, %v595
        %597 = vmatmul.bf16.gmra.mxu0 %v522
        %v598 = vpop.f32.mrf.mxu0
        %v599 = vadd.f32 0.0, %v598
        %v600 = vpop.f32.mrf.mxu0
        %v601 = vadd.f32 0.0, %v600
        %602 = vmatmul.bf16.gmra.mxu0 %v525
        %v603 = vpop.f32.mrf.mxu0
        %v604 = vadd.f32 0.0, %v603
        %v605 = vpop.f32.mrf.mxu0
        %v606 = vadd.f32 0.0, %v605
        %607 = vmatmul.bf16.gmra.mxu0 %v528
        %v608 = vpop.f32.mrf.mxu0
        %v609 = vadd.f32 0.0, %v608
        %v610 = vpop.f32.mrf.mxu0
        %v611 = vadd.f32 0.0, %v610
        %612 = vmatmul.bf16.gmra.mxu0 %v531
        %v613 = vpop.f32.mrf.mxu0
        %v614 = vadd.f32 0.0, %v613
        %v615 = vpop.f32.mrf.mxu0
        %v616 = vadd.f32 0.0, %v615
        %617 = vmatmul.bf16.gmra.mxu0 %v534
        %v618 = vpop.f32.mrf.mxu0
        %v619 = vadd.f32 0.0, %v618
        %v620 = vpop.f32.mrf.mxu0
        %v621 = vadd.f32 0.0, %v620
        %622 = vmatmul.bf16.gmra.mxu0 %v537
        %v623 = vpop.f32.mrf.mxu0
        %v624 = vadd.f32 0.0, %v623
        %v625 = vpop.f32.mrf.mxu0
        %v626 = vadd.f32 0.0, %v625
        %627 = vmatmul.bf16.gmra.mxu0 %v540
        %v628 = vpop.f32.mrf.mxu0
        %v629 = vadd.f32 0.0, %v628
        %v630 = vpop.f32.mrf.mxu0
        %v631 = vadd.f32 0.0, %v630
        %632 = vmatmul.bf16.gmra.mxu0 %v543
        %v633 = vpop.f32.mrf.mxu0
        %v634 = vadd.f32 0.0, %v633
        %v635 = vpop.f32.mrf.mxu0
        %v636 = vadd.f32 0.0, %v635
        %637 = vmatmul.bf16.gmra.mxu0 %v546
        %v638 = vpop.f32.mrf.mxu0
        %v639 = vadd.f32 0.0, %v638
        %v640 = vpop.f32.mrf.mxu0
        %v641 = vadd.f32 0.0, %v640
        %642 = vmatmul.bf16.gmra.mxu0 %v549
        %v643 = vpop.f32.mrf.mxu0
        %v644 = vadd.f32 0.0, %v643
        %v645 = vpop.f32.mrf.mxu0
        %v646 = vadd.f32 0.0, %v645
        %647 = vmatmul.bf16.gmra.mxu0 %v552
        %v648 = vpop.f32.mrf.mxu0
        %v649 = vadd.f32 0.0, %v648
        %v650 = vpop.f32.mrf.mxu0
        %v651 = vadd.f32 0.0, %v650
        %652 = vmatmul.bf16.gmra.mxu0 %v555
        %v653 = vpop.f32.mrf.mxu0
        %v654 = vadd.f32 0.0, %v653
        %v655 = vpop.f32.mrf.mxu0
        %v656 = vadd.f32 0.0, %v655
        %657 = vmatmul.bf16.gmra.mxu0 %v558
        %v658 = vpop.f32.mrf.mxu0
        %v659 = vadd.f32 0.0, %v658
        %v660 = vpop.f32.mrf.mxu0
        %v661 = vadd.f32 0.0, %v660
        %662 = vdwg.mxu0
        %v663 = vsel %vm505, %v337, 0
        %v665 = vsel %vm505, %v338, 0
        %v667 = vsel %vm505, %v339, 0
        %v669 = vsel %vm505, %v340, 0
        %v671 = vsel %vm505, %v341, 0
        %v673 = vsel %vm505, %v342, 0
        %v675 = vsel %vm505, %v343, 0
        %v677 = vsel %vm505, %v344, 0
        %v679 = vsel %vm505, %v345, 0
        %v681 = vsel %vm505, %v346, 0
        %v683 = vsel %vm505, %v347, 0
        %v685 = vsel %vm505, %v348, 0
        %v687 = vsel %vm505, %v349, 0
        %v689 = vsel %vm505, %v350, 0
        %v691 = vsel %vm505, %v351, 0
        %v693 = vsel %vm505, %v352, 0
        %v695 = vsel %vm505, %v353, 0
        %v697 = vsel %vm505, %v354, 0
        %v700 = vsel %vm560, %v259, 0
        %702 = vmatpush.bf16.msra.mxu0 0
        %703 = vmatpush.bf16.msra.mxu0 0
        %704 = vmatpush.bf16.msra.mxu0 0
        %705 = vmatpush.bf16.msra.mxu0 0
        %706 = vmatpush.bf16.msra.mxu0 0
        %707 = vmatpush.bf16.msra.mxu0 0
        %708 = vmatpush.bf16.msra.mxu0 0
        %709 = vmatpush.bf16.msra.mxu0 %v700
        %710 = vmatmul.bf16.gmra.mxu0 %v663
        %v711 = vpop.f32.mrf.mxu0
        %v712 = vadd.f32 %v574, %v711
        %v713 = vpop.f32.mrf.mxu0
        %v714 = vadd.f32 %v576, %v713
        %715 = vmatmul.bf16.gmra.mxu0 %v665
        %v716 = vpop.f32.mrf.mxu0
        %v717 = vadd.f32 %v579, %v716
        %v718 = vpop.f32.mrf.mxu0
        %v719 = vadd.f32 %v581, %v718
        %720 = vmatmul.bf16.gmra.mxu0 %v667
        %v721 = vpop.f32.mrf.mxu0
        %v722 = vadd.f32 %v584, %v721
        %v723 = vpop.f32.mrf.mxu0
        %v724 = vadd.f32 %v586, %v723
        %725 = vmatmul.bf16.gmra.mxu0 %v669
        %v726 = vpop.f32.mrf.mxu0
        %v727 = vadd.f32 %v589, %v726
        %v728 = vpop.f32.mrf.mxu0
        %v729 = vadd.f32 %v591, %v728
        %730 = vmatmul.bf16.gmra.mxu0 %v671
        %v731 = vpop.f32.mrf.mxu0
        %v732 = vadd.f32 %v594, %v731
        %v733 = vpop.f32.mrf.mxu0
        %v734 = vadd.f32 %v596, %v733
        %735 = vmatmul.bf16.gmra.mxu0 %v673
        %v736 = vpop.f32.mrf.mxu0
        %v737 = vadd.f32 %v599, %v736
        %v738 = vpop.f32.mrf.mxu0
        %v739 = vadd.f32 %v601, %v738
        %740 = vmatmul.bf16.gmra.mxu0 %v675
        %v741 = vpop.f32.mrf.mxu0
        %v742 = vadd.f32 %v604, %v741
        %v743 = vpop.f32.mrf.mxu0
        %v744 = vadd.f32 %v606, %v743
        %745 = vmatmul.bf16.gmra.mxu0 %v677
        %v746 = vpop.f32.mrf.mxu0
        %v747 = vadd.f32 %v609, %v746
        %v748 = vpop.f32.mrf.mxu0
        %v749 = vadd.f32 %v611, %v748
        %750 = vmatmul.bf16.gmra.mxu0 %v679
        %v751 = vpop.f32.mrf.mxu0
        %v752 = vadd.f32 %v614, %v751
        %v753 = vpop.f32.mrf.mxu0
        %v754 = vadd.f32 %v616, %v753
        %755 = vmatmul.bf16.gmra.mxu0 %v681
        %v756 = vpop.f32.mrf.mxu0
        %v757 = vadd.f32 %v619, %v756
        %v758 = vpop.f32.mrf.mxu0
        %v759 = vadd.f32 %v621, %v758
        %760 = vmatmul.bf16.gmra.mxu0 %v683
        %v761 = vpop.f32.mrf.mxu0
        %v762 = vadd.f32 %v624, %v761
        %v763 = vpop.f32.mrf.mxu0
        %v764 = vadd.f32 %v626, %v763
        %765 = vmatmul.bf16.gmra.mxu0 %v685
        %v766 = vpop.f32.mrf.mxu0
        %v767 = vadd.f32 %v629, %v766
        %v768 = vpop.f32.mrf.mxu0
        %v769 = vadd.f32 %v631, %v768
        %770 = vmatmul.bf16.gmra.mxu0 %v687
        %v771 = vpop.f32.mrf.mxu0
        %v772 = vadd.f32 %v634, %v771
        %v773 = vpop.f32.mrf.mxu0
        %v774 = vadd.f32 %v636, %v773
        %775 = vmatmul.bf16.gmra.mxu0 %v689
        %v776 = vpop.f32.mrf.mxu0
        %v777 = vadd.f32 %v639, %v776
        %v778 = vpop.f32.mrf.mxu0
        %v779 = vadd.f32 %v641, %v778
        %780 = vmatmul.bf16.gmra.mxu0 %v691
        %v781 = vpop.f32.mrf.mxu0
        %v782 = vadd.f32 %v644, %v781
        %v783 = vpop.f32.mrf.mxu0
        %v784 = vadd.f32 %v646, %v783
        %785 = vmatmul.bf16.gmra.mxu0 %v693
        %v786 = vpop.f32.mrf.mxu0
        %v787 = vadd.f32 %v649, %v786
        %v788 = vpop.f32.mrf.mxu0
        %v789 = vadd.f32 %v651, %v788
        %790 = vmatmul.bf16.gmra.mxu0 %v695
        %v791 = vpop.f32.mrf.mxu0
        %v792 = vadd.f32 %v654, %v791
        %v793 = vpop.f32.mrf.mxu0
        %v794 = vadd.f32 %v656, %v793
        %795 = vmatmul.bf16.gmra.mxu0 %v697
        %v796 = vpop.f32.mrf.mxu0
        %v797 = vadd.f32 %v659, %v796
        %v798 = vpop.f32.mrf.mxu0
        %v799 = vadd.f32 %v661, %v798
        %800 = vdwg.mxu0
        %v801 = vld [vmem:[%s221] sm:$0xe]
        %s802 = scalar_lea.vmem %s1, 4
        %v803 = vld [vmem:[%s802] sm:$0x3]
        %v805 = vunpack.c.l.b16 %v801
        %v806 = vpack.c.b16 %v301, %v805
        %vm807 = vcmask 1046528
        %v808 = vrot.slane %v806, 1
        %v809 = vrot.slane %v338, 1
        %v810 = vsel %vm807, %v808, %v809
        %v811 = vrot.slane %v339, 1
        %v812 = vsel %vm807, %v809, %v811
        %v813 = vrot.slane %v340, 1
        %v814 = vsel %vm807, %v811, %v813
        %v815 = vrot.slane %v341, 1
        %v816 = vsel %vm807, %v813, %v815
        %v817 = vrot.slane %v342, 1
        %v818 = vsel %vm807, %v815, %v817
        %v819 = vrot.slane %v343, 1
        %v820 = vsel %vm807, %v817, %v819
        %v821 = vrot.slane %v344, 1
        %v822 = vsel %vm807, %v819, %v821
        %v823 = vrot.slane %v345, 1
        %v824 = vsel %vm807, %v821, %v823
        %v825 = vrot.slane %v346, 1
        %v826 = vsel %vm807, %v823, %v825
        %v827 = vrot.slane %v347, 1
        %v828 = vsel %vm807, %v825, %v827
        %v829 = vrot.slane %v348, 1
        %v830 = vsel %vm807, %v827, %v829
        %v831 = vrot.slane %v349, 1
        %v832 = vsel %vm807, %v829, %v831
        %v833 = vrot.slane %v350, 1
        %v834 = vsel %vm807, %v831, %v833
        %v835 = vrot.slane %v351, 1
        %v836 = vsel %vm807, %v833, %v835
        %v837 = vrot.slane %v352, 1
        %v838 = vsel %vm807, %v835, %v837
        %v839 = vrot.slane %v353, 1
        %v840 = vsel %vm807, %v837, %v839
        %v841 = vrot.slane %v354, 1
        %v842 = vsel %vm807, %v839, %v841
        %v843 = vrot.slane %v355, 1
        %v844 = vsel %vm807, %v841, %v843
        %v846 = vsel %vm505, %v810, 0
        %v849 = vsel %vm505, %v812, 0
        %v852 = vsel %vm505, %v814, 0
        %v855 = vsel %vm505, %v816, 0
        %v858 = vsel %vm505, %v818, 0
        %v861 = vsel %vm505, %v820, 0
        %v864 = vsel %vm505, %v822, 0
        %v867 = vsel %vm505, %v824, 0
        %v870 = vsel %vm505, %v826, 0
        %v873 = vsel %vm505, %v828, 0
        %v876 = vsel %vm505, %v830, 0
        %v879 = vsel %vm505, %v832, 0
        %v882 = vsel %vm505, %v834, 0
        %v885 = vsel %vm505, %v836, 0
        %v888 = vsel %vm505, %v838, 0
        %v891 = vsel %vm505, %v840, 0
        %v894 = vsel %vm505, %v842, 0
        %v897 = vsel %vm505, %v844, 0
        %v900 = vsel %vm560, %v803, 0
        %902 = vmatpush.bf16.msra.mxu0 0
        %903 = vmatpush.bf16.msra.mxu0 0
        %904 = vmatpush.bf16.msra.mxu0 0
        %905 = vmatpush.bf16.msra.mxu0 0
        %906 = vmatpush.bf16.msra.mxu0 0
        %907 = vmatpush.bf16.msra.mxu0 0
        %908 = vmatpush.bf16.msra.mxu0 0
        %909 = vmatpush.bf16.msra.mxu0 %v900
        %910 = vmatmul.bf16.gmra.mxu0 %v846
        %v911 = vpop.f32.mrf.mxu0
        %v912 = vadd.f32 0.0, %v911
        %v913 = vpop.f32.mrf.mxu0
        %v914 = vadd.f32 0.0, %v913
        %915 = vmatmul.bf16.gmra.mxu0 %v849
        %v916 = vpop.f32.mrf.mxu0
        %v917 = vadd.f32 0.0, %v916
        %v918 = vpop.f32.mrf.mxu0
        %v919 = vadd.f32 0.0, %v918
        %920 = vmatmul.bf16.gmra.mxu0 %v852
        %v921 = vpop.f32.mrf.mxu0
        %v922 = vadd.f32 0.0, %v921
        %v923 = vpop.f32.mrf.mxu0
        %v924 = vadd.f32 0.0, %v923
        %925 = vmatmul.bf16.gmra.mxu0 %v855
        %v926 = vpop.f32.mrf.mxu0
        %v927 = vadd.f32 0.0, %v926
        %v928 = vpop.f32.mrf.mxu0
        %v929 = vadd.f32 0.0, %v928
        %930 = vmatmul.bf16.gmra.mxu0 %v858
        %v931 = vpop.f32.mrf.mxu0
        %v932 = vadd.f32 0.0, %v931
        %v933 = vpop.f32.mrf.mxu0
        %v934 = vadd.f32 0.0, %v933
        %935 = vmatmul.bf16.gmra.mxu0 %v861
        %v936 = vpop.f32.mrf.mxu0
        %v937 = vadd.f32 0.0, %v936
        %v938 = vpop.f32.mrf.mxu0
        %v939 = vadd.f32 0.0, %v938
        %940 = vmatmul.bf16.gmra.mxu0 %v864
        %v941 = vpop.f32.mrf.mxu0
        %v942 = vadd.f32 0.0, %v941
        %v943 = vpop.f32.mrf.mxu0
        %v944 = vadd.f32 0.0, %v943
        %945 = vmatmul.bf16.gmra.mxu0 %v867
        %v946 = vpop.f32.mrf.mxu0
        %v947 = vadd.f32 0.0, %v946
        %v948 = vpop.f32.mrf.mxu0
        %v949 = vadd.f32 0.0, %v948
        %950 = vmatmul.bf16.gmra.mxu0 %v870
        %v951 = vpop.f32.mrf.mxu0
        %v952 = vadd.f32 0.0, %v951
        %v953 = vpop.f32.mrf.mxu0
        %v954 = vadd.f32 0.0, %v953
        %955 = vmatmul.bf16.gmra.mxu0 %v873
        %v956 = vpop.f32.mrf.mxu0
        %v957 = vadd.f32 0.0, %v956
        %v958 = vpop.f32.mrf.mxu0
        %v959 = vadd.f32 0.0, %v958
        %960 = vmatmul.bf16.gmra.mxu0 %v876
        %v961 = vpop.f32.mrf.mxu0
        %v962 = vadd.f32 0.0, %v961
        %v963 = vpop.f32.mrf.mxu0
        %v964 = vadd.f32 0.0, %v963
        %965 = vmatmul.bf16.gmra.mxu0 %v879
        %v966 = vpop.f32.mrf.mxu0
        %v967 = vadd.f32 0.0, %v966
        %v968 = vpop.f32.mrf.mxu0
        %v969 = vadd.f32 0.0, %v968
        %970 = vmatmul.bf16.gmra.mxu0 %v882
        %v971 = vpop.f32.mrf.mxu0
        %v972 = vadd.f32 0.0, %v971
        %v973 = vpop.f32.mrf.mxu0
        %v974 = vadd.f32 0.0, %v973
        %975 = vmatmul.bf16.gmra.mxu0 %v885
        %v976 = vpop.f32.mrf.mxu0
        %v977 = vadd.f32 0.0, %v976
        %v978 = vpop.f32.mrf.mxu0
        %v979 = vadd.f32 0.0, %v978
        %980 = vmatmul.bf16.gmra.mxu0 %v888
        %v981 = vpop.f32.mrf.mxu0
        %v982 = vadd.f32 0.0, %v981
        %v983 = vpop.f32.mrf.mxu0
        %v984 = vadd.f32 0.0, %v983
        %985 = vmatmul.bf16.gmra.mxu0 %v891
        %v986 = vpop.f32.mrf.mxu0
        %v987 = vadd.f32 0.0, %v986
        %v988 = vpop.f32.mrf.mxu0
        %v989 = vadd.f32 0.0, %v988
        %990 = vmatmul.bf16.gmra.mxu0 %v894
        %v991 = vpop.f32.mrf.mxu0
        %v992 = vadd.f32 0.0, %v991
        %v993 = vpop.f32.mrf.mxu0
        %v994 = vadd.f32 0.0, %v993
        %995 = vmatmul.bf16.gmra.mxu0 %v897
        %v996 = vpop.f32.mrf.mxu0
        %v997 = vadd.f32 0.0, %v996
        %v998 = vpop.f32.mrf.mxu0
        %v999 = vadd.f32 0.0, %v998
        %1000 = vdwg.mxu0
        %v1001 = vadd.f32 %v712, %v912
        %v1002 = vadd.f32 %v714, %v914
        %v1003 = vadd.f32 %v717, %v917
        %v1004 = vadd.f32 %v719, %v919
        %v1005 = vadd.f32 %v722, %v922
        %v1006 = vadd.f32 %v724, %v924
        %v1007 = vadd.f32 %v727, %v927
        %v1008 = vadd.f32 %v729, %v929
        %v1009 = vadd.f32 %v732, %v932
        %v1010 = vadd.f32 %v734, %v934
        %v1011 = vadd.f32 %v737, %v937
        %v1012 = vadd.f32 %v739, %v939
        %v1013 = vadd.f32 %v742, %v942
        %v1014 = vadd.f32 %v744, %v944
        %v1015 = vadd.f32 %v747, %v947
        %v1016 = vadd.f32 %v749, %v949
        %v1017 = vadd.f32 %v752, %v952
        %v1018 = vadd.f32 %v754, %v954
        %v1019 = vadd.f32 %v757, %v957
        %v1020 = vadd.f32 %v759, %v959
        %v1021 = vadd.f32 %v762, %v962
        %v1022 = vadd.f32 %v764, %v964
        %v1023 = vadd.f32 %v767, %v967
        %v1024 = vadd.f32 %v769, %v969
        %v1025 = vadd.f32 %v772, %v972
        %v1026 = vadd.f32 %v774, %v974
        %v1027 = vadd.f32 %v777, %v977
        %v1028 = vadd.f32 %v779, %v979
        %v1029 = vadd.f32 %v782, %v982
        %v1030 = vadd.f32 %v784, %v984
        %v1031 = vadd.f32 %v787, %v987
        %v1032 = vadd.f32 %v789, %v989
        %v1033 = vadd.f32 %v792, %v992
        %v1034 = vadd.f32 %v794, %v994
        %v1035 = vadd.f32 %v797, %v997
        %v1036 = vadd.f32 %v799, %v999
        %v1037 = vld [vmem:[%s221 + $0x8] sm:$0xe]
        %v1038 = vld [vmem:[%s221 + $0xc] sm:$0xf]
        %v1039 = vld [vmem:[%s221 + $0x10] sm:$0xf]
        %v1040 = vld [vmem:[%s221 + $0x14] sm:$0xf]
        %v1041 = vld [vmem:[%s221 + $0x18] sm:$0xf]
        %v1042 = vld [vmem:[%s221 + $0x1c] sm:$0xf]
        %v1043 = vld [vmem:[%s221 + $0x20] sm:$0xf]
        %v1044 = vld [vmem:[%s221 + $0x24] sm:$0xf]
        %v1045 = vld [vmem:[%s221 + $0x28] sm:$0xf]
        %v1046 = vld [vmem:[%s221 + $0x2c] sm:$0xf]
        %v1047 = vld [vmem:[%s221 + $0x30] sm:$0xf]
        %v1048 = vld [vmem:[%s221 + $0x34] sm:$0xf]
        %v1049 = vld [vmem:[%s221 + $0x38] sm:$0xf]
        %v1050 = vld [vmem:[%s221 + $0x3c] sm:$0xf]
        %v1051 = vld [vmem:[%s221 + $0x40] sm:$0xf]
        %v1052 = vld [vmem:[%s221 + $0x44] sm:$0xf]
        %v1053 = vld [vmem:[%s221 + $0x48] sm:$0xf]
        %v1054 = vld [vmem:[%s221 + $0x4c] sm:$0xf]
        %v1055 = vld [vmem:[%s221 + $0x50] sm:$0xf]
        %v1056 = vld [vmem:[%s221 + $0x54] sm:$0xf]
        %v1057 = vld [vmem:[%s221 + $0x58] sm:$0xf]
        %v1058 = vld [vmem:[%s221 + $0x5c] sm:$0xf]
        %v1059 = vld [vmem:[%s221 + $0x60] sm:$0xf]
        %v1060 = vld [vmem:[%s221 + $0x64] sm:$0xf]
        %v1061 = vld [vmem:[%s221 + $0x68] sm:$0xf]
        %v1062 = vld [vmem:[%s221 + $0x6c] sm:$0xf]
        %v1063 = vld [vmem:[%s221 + $0x70] sm:$0xf]
        %v1064 = vld [vmem:[%s221 + $0x74] sm:$0xf]
        %v1065 = vld [vmem:[%s221 + $0x78] sm:$0xf]
        %v1066 = vld [vmem:[%s221 + $0x7c] sm:$0xf]
        %v1067 = vld [vmem:[%s221 + $0x80] sm:$0xf]
        %v1068 = vld [vmem:[%s221 + $0x84] sm:$0xf]
        %v1069 = vld [vmem:[%s221 + $0x88] sm:$0xf]
        %v1070 = vld [vmem:[%s221 + $0x8c] sm:$0xf]
        %v1071 = vld [vmem:[%s221 + $0x90] sm:$0xf]
        %v1072 = vld [vmem:[%s221 + $0x94] sm:$0xf]
        %v1073 = vld [vmem:[%s221 + $0x98] sm:$0x1]
        %s1074 = scalar_lea.vmem %s1, 6
        %v1075 = vld [vmem:[%s1074] sm:$0x3]
        %v1113 = vunpack.c.l.b16 %v1037
        %v1114 = vunpack.c.l.b16 %v1038
        %v1115 = vunpack.c.l.b16 %v1039
        %v1116 = vunpack.c.l.b16 %v1040
        %v1117 = vunpack.c.l.b16 %v1041
        %v1118 = vunpack.c.l.b16 %v1042
        %v1119 = vunpack.c.l.b16 %v1043
        %v1120 = vunpack.c.l.b16 %v1044
        %v1121 = vunpack.c.l.b16 %v1045
        %v1122 = vunpack.c.l.b16 %v1046
        %v1123 = vunpack.c.l.b16 %v1047
        %v1124 = vunpack.c.l.b16 %v1048
        %v1125 = vunpack.c.l.b16 %v1049
        %v1126 = vunpack.c.l.b16 %v1050
        %v1127 = vunpack.c.l.b16 %v1051
        %v1128 = vunpack.c.l.b16 %v1052
        %v1129 = vunpack.c.l.b16 %v1053
        %v1130 = vunpack.c.l.b16 %v1054
        %v1131 = vunpack.c.l.b16 %v1055
        %v1132 = vunpack.c.l.b16 %v1056
        %v1133 = vunpack.c.l.b16 %v1057
        %v1134 = vunpack.c.l.b16 %v1058
        %v1135 = vunpack.c.l.b16 %v1059
        %v1136 = vunpack.c.l.b16 %v1060
        %v1137 = vunpack.c.l.b16 %v1061
        %v1138 = vunpack.c.l.b16 %v1062
        %v1139 = vunpack.c.l.b16 %v1063
        %v1140 = vunpack.c.l.b16 %v1064
        %v1141 = vunpack.c.l.b16 %v1065
        %v1142 = vunpack.c.l.b16 %v1066
        %v1143 = vunpack.c.l.b16 %v1067
        %v1144 = vunpack.c.l.b16 %v1068
        %v1145 = vunpack.c.l.b16 %v1069
        %v1146 = vunpack.c.l.b16 %v1070
        %v1147 = vunpack.c.l.b16 %v1071
        %v1148 = vunpack.c.l.b16 %v1072
        %v1149 = vunpack.c.l.b16 %v1073
        %v1150 = vpack.c.b16 %v1114, %v1113
        %v1151 = vpack.c.b16 %v1116, %v1115
        %v1152 = vpack.c.b16 %v1118, %v1117
        %v1153 = vpack.c.b16 %v1120, %v1119
        %v1154 = vpack.c.b16 %v1122, %v1121
        %v1155 = vpack.c.b16 %v1124, %v1123
        %v1156 = vpack.c.b16 %v1126, %v1125
        %v1157 = vpack.c.b16 %v1128, %v1127
        %v1158 = vpack.c.b16 %v1130, %v1129
        %v1159 = vpack.c.b16 %v1132, %v1131
        %v1160 = vpack.c.b16 %v1134, %v1133
        %v1161 = vpack.c.b16 %v1136, %v1135
        %v1162 = vpack.c.b16 %v1138, %v1137
        %v1163 = vpack.c.b16 %v1140, %v1139
        %v1164 = vpack.c.b16 %v1142, %v1141
        %v1165 = vpack.c.b16 %v1144, %v1143
        %v1166 = vpack.c.b16 %v1146, %v1145
        %v1167 = vpack.c.b16 %v1148, %v1147
        %v1168 = vpack.c.b16 %v1149, %v1149
        %v1169 = vrot.slane %v1150, 1
        %v1170 = vrot.slane %v1151, 1
        %v1171 = vsel %vm807, %v1169, %v1170
        %v1172 = vrot.slane %v1152, 1
        %v1173 = vsel %vm807, %v1170, %v1172
        %v1174 = vrot.slane %v1153, 1
        %v1175 = vsel %vm807, %v1172, %v1174
        %v1176 = vrot.slane %v1154, 1
        %v1177 = vsel %vm807, %v1174, %v1176
        %v1178 = vrot.slane %v1155, 1
        %v1179 = vsel %vm807, %v1176, %v1178
        %v1180 = vrot.slane %v1156, 1
        %v1181 = vsel %vm807, %v1178, %v1180
        %v1182 = vrot.slane %v1157, 1
        %v1183 = vsel %vm807, %v1180, %v1182
        %v1184 = vrot.slane %v1158, 1
        %v1185 = vsel %vm807, %v1182, %v1184
        %v1186 = vrot.slane %v1159, 1
        %v1187 = vsel %vm807, %v1184, %v1186
        %v1188 = vrot.slane %v1160, 1
        %v1189 = vsel %vm807, %v1186, %v1188
        %v1190 = vrot.slane %v1161, 1
        %v1191 = vsel %vm807, %v1188, %v1190
        %v1192 = vrot.slane %v1162, 1
        %v1193 = vsel %vm807, %v1190, %v1192
        %v1194 = vrot.slane %v1163, 1
        %v1195 = vsel %vm807, %v1192, %v1194
        %v1196 = vrot.slane %v1164, 1
        %v1197 = vsel %vm807, %v1194, %v1196
        %v1198 = vrot.slane %v1165, 1
        %v1199 = vsel %vm807, %v1196, %v1198
        %v1200 = vrot.slane %v1166, 1
        %v1201 = vsel %vm807, %v1198, %v1200
        %v1202 = vrot.slane %v1167, 1
        %v1203 = vsel %vm807, %v1200, %v1202
        %v1204 = vrot.slane %v1168, 1
        %v1205 = vsel %vm807, %v1202, %v1204
        %v1207 = vsel %vm505, %v1171, 0
        %v1210 = vsel %vm505, %v1173, 0
        %v1213 = vsel %vm505, %v1175, 0
        %v1216 = vsel %vm505, %v1177, 0
        %v1219 = vsel %vm505, %v1179, 0
        %v1222 = vsel %vm505, %v1181, 0
        %v1225 = vsel %vm505, %v1183, 0
        %v1228 = vsel %vm505, %v1185, 0
        %v1231 = vsel %vm505, %v1187, 0
        %v1234 = vsel %vm505, %v1189, 0
        %v1237 = vsel %vm505, %v1191, 0
        %v1240 = vsel %vm505, %v1193, 0
        %v1243 = vsel %vm505, %v1195, 0
        %v1246 = vsel %vm505, %v1197, 0
        %v1249 = vsel %vm505, %v1199, 0
        %v1252 = vsel %vm505, %v1201, 0
        %v1255 = vsel %vm505, %v1203, 0
        %v1258 = vsel %vm505, %v1205, 0
        %v1261 = vsel %vm560, %v1075, 0
        %1263 = vmatpush.bf16.msra.mxu0 0
        %1264 = vmatpush.bf16.msra.mxu0 0
        %1265 = vmatpush.bf16.msra.mxu0 0
        %1266 = vmatpush.bf16.msra.mxu0 0
        %1267 = vmatpush.bf16.msra.mxu0 0
        %1268 = vmatpush.bf16.msra.mxu0 0
        %1269 = vmatpush.bf16.msra.mxu0 0
        %1270 = vmatpush.bf16.msra.mxu0 %v1261
        %1271 = vmatmul.bf16.gmra.mxu0 %v1207
        %v1272 = vpop.f32.mrf.mxu0
        %v1273 = vadd.f32 0.0, %v1272
        %v1274 = vpop.f32.mrf.mxu0
        %v1275 = vadd.f32 0.0, %v1274
        %1276 = vmatmul.bf16.gmra.mxu0 %v1210
        %v1277 = vpop.f32.mrf.mxu0
        %v1278 = vadd.f32 0.0, %v1277
        %v1279 = vpop.f32.mrf.mxu0
        %v1280 = vadd.f32 0.0, %v1279
        %1281 = vmatmul.bf16.gmra.mxu0 %v1213
        %v1282 = vpop.f32.mrf.mxu0
        %v1283 = vadd.f32 0.0, %v1282
        %v1284 = vpop.f32.mrf.mxu0
        %v1285 = vadd.f32 0.0, %v1284
        %1286 = vmatmul.bf16.gmra.mxu0 %v1216
        %v1287 = vpop.f32.mrf.mxu0
        %v1288 = vadd.f32 0.0, %v1287
        %v1289 = vpop.f32.mrf.mxu0
        %v1290 = vadd.f32 0.0, %v1289
        %1291 = vmatmul.bf16.gmra.mxu0 %v1219
        %v1292 = vpop.f32.mrf.mxu0
        %v1293 = vadd.f32 0.0, %v1292
        %v1294 = vpop.f32.mrf.mxu0
        %v1295 = vadd.f32 0.0, %v1294
        %1296 = vmatmul.bf16.gmra.mxu0 %v1222
        %v1297 = vpop.f32.mrf.mxu0
        %v1298 = vadd.f32 0.0, %v1297
        %v1299 = vpop.f32.mrf.mxu0
        %v1300 = vadd.f32 0.0, %v1299
        %1301 = vmatmul.bf16.gmra.mxu0 %v1225
        %v1302 = vpop.f32.mrf.mxu0
        %v1303 = vadd.f32 0.0, %v1302
        %v1304 = vpop.f32.mrf.mxu0
        %v1305 = vadd.f32 0.0, %v1304
        %1306 = vmatmul.bf16.gmra.mxu0 %v1228
        %v1307 = vpop.f32.mrf.mxu0
        %v1308 = vadd.f32 0.0, %v1307
        %v1309 = vpop.f32.mrf.mxu0
        %v1310 = vadd.f32 0.0, %v1309
        %1311 = vmatmul.bf16.gmra.mxu0 %v1231
        %v1312 = vpop.f32.mrf.mxu0
        %v1313 = vadd.f32 0.0, %v1312
        %v1314 = vpop.f32.mrf.mxu0
        %v1315 = vadd.f32 0.0, %v1314
        %1316 = vmatmul.bf16.gmra.mxu0 %v1234
        %v1317 = vpop.f32.mrf.mxu0
        %v1318 = vadd.f32 0.0, %v1317
        %v1319 = vpop.f32.mrf.mxu0
        %v1320 = vadd.f32 0.0, %v1319
        %1321 = vmatmul.bf16.gmra.mxu0 %v1237
        %v1322 = vpop.f32.mrf.mxu0
        %v1323 = vadd.f32 0.0, %v1322
        %v1324 = vpop.f32.mrf.mxu0
        %v1325 = vadd.f32 0.0, %v1324
        %1326 = vmatmul.bf16.gmra.mxu0 %v1240
        %v1327 = vpop.f32.mrf.mxu0
        %v1328 = vadd.f32 0.0, %v1327
        %v1329 = vpop.f32.mrf.mxu0
        %v1330 = vadd.f32 0.0, %v1329
        %1331 = vmatmul.bf16.gmra.mxu0 %v1243
        %v1332 = vpop.f32.mrf.mxu0
        %v1333 = vadd.f32 0.0, %v1332
        %v1334 = vpop.f32.mrf.mxu0
        %v1335 = vadd.f32 0.0, %v1334
        %1336 = vmatmul.bf16.gmra.mxu0 %v1246
        %v1337 = vpop.f32.mrf.mxu0
        %v1338 = vadd.f32 0.0, %v1337
        %v1339 = vpop.f32.mrf.mxu0
        %v1340 = vadd.f32 0.0, %v1339
        %1341 = vmatmul.bf16.gmra.mxu0 %v1249
        %v1342 = vpop.f32.mrf.mxu0
        %v1343 = vadd.f32 0.0, %v1342
        %v1344 = vpop.f32.mrf.mxu0
        %v1345 = vadd.f32 0.0, %v1344
        %1346 = vmatmul.bf16.gmra.mxu0 %v1252
        %v1347 = vpop.f32.mrf.mxu0
        %v1348 = vadd.f32 0.0, %v1347
        %v1349 = vpop.f32.mrf.mxu0
        %v1350 = vadd.f32 0.0, %v1349
        %1351 = vmatmul.bf16.gmra.mxu0 %v1255
        %v1352 = vpop.f32.mrf.mxu0
        %v1353 = vadd.f32 0.0, %v1352
        %v1354 = vpop.f32.mrf.mxu0
        %v1355 = vadd.f32 0.0, %v1354
        %1356 = vmatmul.bf16.gmra.mxu0 %v1258
        %v1357 = vpop.f32.mrf.mxu0
        %v1358 = vadd.f32 0.0, %v1357
        %v1359 = vpop.f32.mrf.mxu0
        %v1360 = vadd.f32 0.0, %v1359
        %1361 = vdwg.mxu0
        %v1362 = vadd.f32 %v1001, %v1273
        %v1363 = vadd.f32 %v1002, %v1275
        %v1364 = vadd.f32 %v1003, %v1278
        %v1365 = vadd.f32 %v1004, %v1280
        %v1366 = vadd.f32 %v1005, %v1283
        %v1367 = vadd.f32 %v1006, %v1285
        %v1368 = vadd.f32 %v1007, %v1288
        %v1369 = vadd.f32 %v1008, %v1290
        %v1370 = vadd.f32 %v1009, %v1293
        %v1371 = vadd.f32 %v1010, %v1295
        %v1372 = vadd.f32 %v1011, %v1298
        %v1373 = vadd.f32 %v1012, %v1300
        %v1374 = vadd.f32 %v1013, %v1303
        %v1375 = vadd.f32 %v1014, %v1305
        %v1376 = vadd.f32 %v1015, %v1308
        %v1377 = vadd.f32 %v1016, %v1310
        %v1378 = vadd.f32 %v1017, %v1313
        %v1379 = vadd.f32 %v1018, %v1315
        %v1380 = vadd.f32 %v1019, %v1318
        %v1381 = vadd.f32 %v1020, %v1320
        %v1382 = vadd.f32 %v1021, %v1323
        %v1383 = vadd.f32 %v1022, %v1325
        %v1384 = vadd.f32 %v1023, %v1328
        %v1385 = vadd.f32 %v1024, %v1330
        %v1386 = vadd.f32 %v1025, %v1333
        %v1387 = vadd.f32 %v1026, %v1335
        %v1388 = vadd.f32 %v1027, %v1338
        %v1389 = vadd.f32 %v1028, %v1340
        %v1390 = vadd.f32 %v1029, %v1343
        %v1391 = vadd.f32 %v1030, %v1345
        %v1392 = vadd.f32 %v1031, %v1348
        %v1393 = vadd.f32 %v1032, %v1350
        %v1394 = vadd.f32 %v1033, %v1353
        %v1395 = vadd.f32 %v1034, %v1355
        %v1396 = vadd.f32 %v1035, %v1358
        %v1397 = vadd.f32 %v1036, %v1360
        %v1398 = vld [vmem:[%s221 + $0x98] sm:$0x3]
        %s1399 = scalar_lea.vmem %s1, 8
        %v1400 = vld [vmem:[%s1399] sm:$0x3]
        %v1402 = vunpack.c.l.b16 %v1398
        %v1403 = vpack.c.b16 %v1402, %v1402
        %vm1404 = vsmask.f32 6400
        %v1406 = vshrl.u32 %v1150, 16
        %v1408 = vrot.slane %v1406, 1
        %v1409 = vshll.u32 %v1150, 16
        %v1411 = vrot.slane %v1409, 2
        %v1412 = vor.u32 %v1408, %v1411
        %v1414 = vshrl.u32 %v1151, 16
        %v1416 = vrot.slane %v1414, 1
        %v1417 = vshll.u32 %v1151, 16
        %v1419 = vrot.slane %v1417, 2
        %v1420 = vor.u32 %v1416, %v1419
        %v1421 = vsel %vm1404, %v1412, %v1420
        %v1423 = vshrl.u32 %v1152, 16
        %v1425 = vrot.slane %v1423, 1
        %v1426 = vshll.u32 %v1152, 16
        %v1428 = vrot.slane %v1426, 2
        %v1429 = vor.u32 %v1425, %v1428
        %v1430 = vsel %vm1404, %v1420, %v1429
        %v1432 = vshrl.u32 %v1153, 16
        %v1434 = vrot.slane %v1432, 1
        %v1435 = vshll.u32 %v1153, 16
        %v1437 = vrot.slane %v1435, 2
        %v1438 = vor.u32 %v1434, %v1437
        %v1439 = vsel %vm1404, %v1429, %v1438
        %v1441 = vshrl.u32 %v1154, 16
        %v1443 = vrot.slane %v1441, 1
        %v1444 = vshll.u32 %v1154, 16
        %v1446 = vrot.slane %v1444, 2
        %v1447 = vor.u32 %v1443, %v1446
        %v1448 = vsel %vm1404, %v1438, %v1447
        %v1450 = vshrl.u32 %v1155, 16
        %v1452 = vrot.slane %v1450, 1
        %v1453 = vshll.u32 %v1155, 16
        %v1455 = vrot.slane %v1453, 2
        %v1456 = vor.u32 %v1452, %v1455
        %v1457 = vsel %vm1404, %v1447, %v1456
        %v1459 = vshrl.u32 %v1156, 16
        %v1461 = vrot.slane %v1459, 1
        %v1462 = vshll.u32 %v1156, 16
        %v1464 = vrot.slane %v1462, 2
        %v1465 = vor.u32 %v1461, %v1464
        %v1466 = vsel %vm1404, %v1456, %v1465
        %v1468 = vshrl.u32 %v1157, 16
        %v1470 = vrot.slane %v1468, 1
        %v1471 = vshll.u32 %v1157, 16
        %v1473 = vrot.slane %v1471, 2
        %v1474 = vor.u32 %v1470, %v1473
        %v1475 = vsel %vm1404, %v1465, %v1474
        %v1477 = vshrl.u32 %v1158, 16
        %v1479 = vrot.slane %v1477, 1
        %v1480 = vshll.u32 %v1158, 16
        %v1482 = vrot.slane %v1480, 2
        %v1483 = vor.u32 %v1479, %v1482
        %v1484 = vsel %vm1404, %v1474, %v1483
        %v1486 = vshrl.u32 %v1159, 16
        %v1488 = vrot.slane %v1486, 1
        %v1489 = vshll.u32 %v1159, 16
        %v1491 = vrot.slane %v1489, 2
        %v1492 = vor.u32 %v1488, %v1491
        %v1493 = vsel %vm1404, %v1483, %v1492
        %v1495 = vshrl.u32 %v1160, 16
        %v1497 = vrot.slane %v1495, 1
        %v1498 = vshll.u32 %v1160, 16
        %v1500 = vrot.slane %v1498, 2
        %v1501 = vor.u32 %v1497, %v1500
        %v1502 = vsel %vm1404, %v1492, %v1501
        %v1504 = vshrl.u32 %v1161, 16
        %v1506 = vrot.slane %v1504, 1
        %v1507 = vshll.u32 %v1161, 16
        %v1509 = vrot.slane %v1507, 2
        %v1510 = vor.u32 %v1506, %v1509
        %v1511 = vsel %vm1404, %v1501, %v1510
        %v1513 = vshrl.u32 %v1162, 16
        %v1515 = vrot.slane %v1513, 1
        %v1516 = vshll.u32 %v1162, 16
        %v1518 = vrot.slane %v1516, 2
        %v1519 = vor.u32 %v1515, %v1518
        %v1520 = vsel %vm1404, %v1510, %v1519
        %v1522 = vshrl.u32 %v1163, 16
        %v1524 = vrot.slane %v1522, 1
        %v1525 = vshll.u32 %v1163, 16
        %v1527 = vrot.slane %v1525, 2
        %v1528 = vor.u32 %v1524, %v1527
        %v1529 = vsel %vm1404, %v1519, %v1528
        %v1531 = vshrl.u32 %v1164, 16
        %v1533 = vrot.slane %v1531, 1
        %v1534 = vshll.u32 %v1164, 16
        %v1536 = vrot.slane %v1534, 2
        %v1537 = vor.u32 %v1533, %v1536
        %v1538 = vsel %vm1404, %v1528, %v1537
        %v1540 = vshrl.u32 %v1165, 16
        %v1542 = vrot.slane %v1540, 1
        %v1543 = vshll.u32 %v1165, 16
        %v1545 = vrot.slane %v1543, 2
        %v1546 = vor.u32 %v1542, %v1545
        %v1547 = vsel %vm1404, %v1537, %v1546
        %v1549 = vshrl.u32 %v1166, 16
        %v1551 = vrot.slane %v1549, 1
        %v1552 = vshll.u32 %v1166, 16
        %v1554 = vrot.slane %v1552, 2
        %v1555 = vor.u32 %v1551, %v1554
        %v1556 = vsel %vm1404, %v1546, %v1555
        %v1558 = vshrl.u32 %v1167, 16
        %v1560 = vrot.slane %v1558, 1
        %v1561 = vshll.u32 %v1167, 16
        %v1563 = vrot.slane %v1561, 2
        %v1564 = vor.u32 %v1560, %v1563
        %v1565 = vsel %vm1404, %v1555, %v1564
        %v1567 = vshrl.u32 %v1403, 16
        %v1569 = vrot.slane %v1567, 1
        %v1570 = vshll.u32 %v1403, 16
        %v1572 = vrot.slane %v1570, 2
        %v1573 = vor.u32 %v1569, %v1572
        %v1574 = vsel %vm1404, %v1564, %v1573
        %v1576 = vsel %vm505, %v1421, 0
        %v1579 = vsel %vm505, %v1430, 0
        %v1582 = vsel %vm505, %v1439, 0
        %v1585 = vsel %vm505, %v1448, 0
        %v1588 = vsel %vm505, %v1457, 0
        %v1591 = vsel %vm505, %v1466, 0
        %v1594 = vsel %vm505, %v1475, 0
        %v1597 = vsel %vm505, %v1484, 0
        %v1600 = vsel %vm505, %v1493, 0
        %v1603 = vsel %vm505, %v1502, 0
        %v1606 = vsel %vm505, %v1511, 0
        %v1609 = vsel %vm505, %v1520, 0
        %v1612 = vsel %vm505, %v1529, 0
        %v1615 = vsel %vm505, %v1538, 0
        %v1618 = vsel %vm505, %v1547, 0
        %v1621 = vsel %vm505, %v1556, 0
        %v1624 = vsel %vm505, %v1565, 0
        %v1627 = vsel %vm505, %v1574, 0
        %v1630 = vsel %vm560, %v1400, 0
        %1632 = vmatpush.bf16.msra.mxu0 0
        %1633 = vmatpush.bf16.msra.mxu0 0
        %1634 = vmatpush.bf16.msra.mxu0 0
        %1635 = vmatpush.bf16.msra.mxu0 0
        %1636 = vmatpush.bf16.msra.mxu0 0
        %1637 = vmatpush.bf16.msra.mxu0 0
        %1638 = vmatpush.bf16.msra.mxu0 0
        %1639 = vmatpush.bf16.msra.mxu0 %v1630
        %1640 = vmatmul.bf16.gmra.mxu0 %v1576
        %v1641 = vpop.f32.mrf.mxu0
        %v1642 = vadd.f32 0.0, %v1641
        %v1643 = vpop.f32.mrf.mxu0
        %v1644 = vadd.f32 0.0, %v1643
        %1645 = vmatmul.bf16.gmra.mxu0 %v1579
        %v1646 = vpop.f32.mrf.mxu0
        %v1647 = vadd.f32 0.0, %v1646
        %v1648 = vpop.f32.mrf.mxu0
        %v1649 = vadd.f32 0.0, %v1648
        %1650 = vmatmul.bf16.gmra.mxu0 %v1582
        %v1651 = vpop.f32.mrf.mxu0
        %v1652 = vadd.f32 0.0, %v1651
        %v1653 = vpop.f32.mrf.mxu0
        %v1654 = vadd.f32 0.0, %v1653
        %1655 = vmatmul.bf16.gmra.mxu0 %v1585
        %v1656 = vpop.f32.mrf.mxu0
        %v1657 = vadd.f32 0.0, %v1656
        %v1658 = vpop.f32.mrf.mxu0
        %v1659 = vadd.f32 0.0, %v1658
        %1660 = vmatmul.bf16.gmra.mxu0 %v1588
        %v1661 = vpop.f32.mrf.mxu0
        %v1662 = vadd.f32 0.0, %v1661
        %v1663 = vpop.f32.mrf.mxu0
        %v1664 = vadd.f32 0.0, %v1663
        %1665 = vmatmul.bf16.gmra.mxu0 %v1591
        %v1666 = vpop.f32.mrf.mxu0
        %v1667 = vadd.f32 0.0, %v1666
        %v1668 = vpop.f32.mrf.mxu0
        %v1669 = vadd.f32 0.0, %v1668
        %1670 = vmatmul.bf16.gmra.mxu0 %v1594
        %v1671 = vpop.f32.mrf.mxu0
        %v1672 = vadd.f32 0.0, %v1671
        %v1673 = vpop.f32.mrf.mxu0
        %v1674 = vadd.f32 0.0, %v1673
        %1675 = vmatmul.bf16.gmra.mxu0 %v1597
        %v1676 = vpop.f32.mrf.mxu0
        %v1677 = vadd.f32 0.0, %v1676
        %v1678 = vpop.f32.mrf.mxu0
        %v1679 = vadd.f32 0.0, %v1678
        %1680 = vmatmul.bf16.gmra.mxu0 %v1600
        %v1681 = vpop.f32.mrf.mxu0
        %v1682 = vadd.f32 0.0, %v1681
        %v1683 = vpop.f32.mrf.mxu0
        %v1684 = vadd.f32 0.0, %v1683
        %1685 = vmatmul.bf16.gmra.mxu0 %v1603
        %v1686 = vpop.f32.mrf.mxu0
        %v1687 = vadd.f32 0.0, %v1686
        %v1688 = vpop.f32.mrf.mxu0
        %v1689 = vadd.f32 0.0, %v1688
        %1690 = vmatmul.bf16.gmra.mxu0 %v1606
        %v1691 = vpop.f32.mrf.mxu0
        %v1692 = vadd.f32 0.0, %v1691
        %v1693 = vpop.f32.mrf.mxu0
        %v1694 = vadd.f32 0.0, %v1693
        %1695 = vmatmul.bf16.gmra.mxu0 %v1609
        %v1696 = vpop.f32.mrf.mxu0
        %v1697 = vadd.f32 0.0, %v1696
        %v1698 = vpop.f32.mrf.mxu0
        %v1699 = vadd.f32 0.0, %v1698
        %1700 = vmatmul.bf16.gmra.mxu0 %v1612
        %v1701 = vpop.f32.mrf.mxu0
        %v1702 = vadd.f32 0.0, %v1701
        %v1703 = vpop.f32.mrf.mxu0
        %v1704 = vadd.f32 0.0, %v1703
        %1705 = vmatmul.bf16.gmra.mxu0 %v1615
        %v1706 = vpop.f32.mrf.mxu0
        %v1707 = vadd.f32 0.0, %v1706
        %v1708 = vpop.f32.mrf.mxu0
        %v1709 = vadd.f32 0.0, %v1708
        %1710 = vmatmul.bf16.gmra.mxu0 %v1618
        %v1711 = vpop.f32.mrf.mxu0
        %v1712 = vadd.f32 0.0, %v1711
        %v1713 = vpop.f32.mrf.mxu0
        %v1714 = vadd.f32 0.0, %v1713
        %1715 = vmatmul.bf16.gmra.mxu0 %v1621
        %v1716 = vpop.f32.mrf.mxu0
        %v1717 = vadd.f32 0.0, %v1716
        %v1718 = vpop.f32.mrf.mxu0
        %v1719 = vadd.f32 0.0, %v1718
        %1720 = vmatmul.bf16.gmra.mxu0 %v1624
        %v1721 = vpop.f32.mrf.mxu0
        %v1722 = vadd.f32 0.0, %v1721
        %v1723 = vpop.f32.mrf.mxu0
        %v1724 = vadd.f32 0.0, %v1723
        %1725 = vmatmul.bf16.gmra.mxu0 %v1627
        %v1726 = vpop.f32.mrf.mxu0
        %v1727 = vadd.f32 0.0, %v1726
        %v1728 = vpop.f32.mrf.mxu0
        %v1729 = vadd.f32 0.0, %v1728
        %1730 = vdwg.mxu0
        %v1731 = vadd.f32 %v1362, %v1642
        %v1732 = vadd.f32 %v1363, %v1644
        %v1733 = vadd.f32 %v1364, %v1647
        %v1734 = vadd.f32 %v1365, %v1649
        %v1735 = vadd.f32 %v1366, %v1652
        %v1736 = vadd.f32 %v1367, %v1654
        %v1737 = vadd.f32 %v1368, %v1657
        %v1738 = vadd.f32 %v1369, %v1659
        %v1739 = vadd.f32 %v1370, %v1662
        %v1740 = vadd.f32 %v1371, %v1664
        %v1741 = vadd.f32 %v1372, %v1667
        %v1742 = vadd.f32 %v1373, %v1669
        %v1743 = vadd.f32 %v1374, %v1672
        %v1744 = vadd.f32 %v1375, %v1674
        %v1745 = vadd.f32 %v1376, %v1677
        %v1746 = vadd.f32 %v1377, %v1679
        %v1747 = vadd.f32 %v1378, %v1682
        %v1748 = vadd.f32 %v1379, %v1684
        %v1749 = vadd.f32 %v1380, %v1687
        %v1750 = vadd.f32 %v1381, %v1689
        %v1751 = vadd.f32 %v1382, %v1692
        %v1752 = vadd.f32 %v1383, %v1694
        %v1753 = vadd.f32 %v1384, %v1697
        %v1754 = vadd.f32 %v1385, %v1699
        %v1755 = vadd.f32 %v1386, %v1702
        %v1756 = vadd.f32 %v1387, %v1704
        %v1757 = vadd.f32 %v1388, %v1707
        %v1758 = vadd.f32 %v1389, %v1709
        %v1759 = vadd.f32 %v1390, %v1712
        %v1760 = vadd.f32 %v1391, %v1714
        %v1761 = vadd.f32 %v1392, %v1717
        %v1762 = vadd.f32 %v1393, %v1719
        %v1763 = vadd.f32 %v1394, %v1722
        %v1764 = vadd.f32 %v1395, %v1724
        %v1765 = vadd.f32 %v1396, %v1727
        %v1766 = vadd.f32 %v1397, %v1729
        %v1767 = vld [vmem:[%s221 + $0x8] sm:$0xc]
        %s1768 = scalar_lea.vmem %s1, 10
        %v1769 = vld [vmem:[%s1768] sm:$0x3]
        %v1771 = vunpack.c.l.b16 %v1767
        %v1772 = vpack.c.b16 %v1114, %v1771
        %vm1773 = vcmask 1045504
        %v1774 = vrot.slane %v1772, 2
        %v1775 = vrot.slane %v1151, 2
        %v1776 = vsel %vm1773, %v1774, %v1775
        %v1777 = vrot.slane %v1152, 2
        %v1778 = vsel %vm1773, %v1775, %v1777
        %v1779 = vrot.slane %v1153, 2
        %v1780 = vsel %vm1773, %v1777, %v1779
        %v1781 = vrot.slane %v1154, 2
        %v1782 = vsel %vm1773, %v1779, %v1781
        %v1783 = vrot.slane %v1155, 2
        %v1784 = vsel %vm1773, %v1781, %v1783
        %v1785 = vrot.slane %v1156, 2
        %v1786 = vsel %vm1773, %v1783, %v1785
        %v1787 = vrot.slane %v1157, 2
        %v1788 = vsel %vm1773, %v1785, %v1787
        %v1789 = vrot.slane %v1158, 2
        %v1790 = vsel %vm1773, %v1787, %v1789
        %v1791 = vrot.slane %v1159, 2
        %v1792 = vsel %vm1773, %v1789, %v1791
        %v1793 = vrot.slane %v1160, 2
        %v1794 = vsel %vm1773, %v1791, %v1793
        %v1795 = vrot.slane %v1161, 2
        %v1796 = vsel %vm1773, %v1793, %v1795
        %v1797 = vrot.slane %v1162, 2
        %v1798 = vsel %vm1773, %v1795, %v1797
        %v1799 = vrot.slane %v1163, 2
        %v1800 = vsel %vm1773, %v1797, %v1799
        %v1801 = vrot.slane %v1164, 2
        %v1802 = vsel %vm1773, %v1799, %v1801
        %v1803 = vrot.slane %v1165, 2
        %v1804 = vsel %vm1773, %v1801, %v1803
        %v1805 = vrot.slane %v1166, 2
        %v1806 = vsel %vm1773, %v1803, %v1805
        %v1807 = vrot.slane %v1167, 2
        %v1808 = vsel %vm1773, %v1805, %v1807
        %v1809 = vrot.slane %v1403, 2
        %v1810 = vsel %vm1773, %v1807, %v1809
        %v1812 = vsel %vm505, %v1776, 0
        %v1815 = vsel %vm505, %v1778, 0
        %v1818 = vsel %vm505, %v1780, 0
        %v1821 = vsel %vm505, %v1782, 0
        %v1824 = vsel %vm505, %v1784, 0
        %v1827 = vsel %vm505, %v1786, 0
        %v1830 = vsel %vm505, %v1788, 0
        %v1833 = vsel %vm505, %v1790, 0
        %v1836 = vsel %vm505, %v1792, 0
        %v1839 = vsel %vm505, %v1794, 0
        %v1842 = vsel %vm505, %v1796, 0
        %v1845 = vsel %vm505, %v1798, 0
        %v1848 = vsel %vm505, %v1800, 0
        %v1851 = vsel %vm505, %v1802, 0
        %v1854 = vsel %vm505, %v1804, 0
        %v1857 = vsel %vm505, %v1806, 0
        %v1860 = vsel %vm505, %v1808, 0
        %v1863 = vsel %vm505, %v1810, 0
        %v1866 = vsel %vm560, %v1769, 0
        %1868 = vmatpush.bf16.msra.mxu0 0
        %1869 = vmatpush.bf16.msra.mxu0 0
        %1870 = vmatpush.bf16.msra.mxu0 0
        %1871 = vmatpush.bf16.msra.mxu0 0
        %1872 = vmatpush.bf16.msra.mxu0 0
        %1873 = vmatpush.bf16.msra.mxu0 0
        %1874 = vmatpush.bf16.msra.mxu0 0
        %1875 = vmatpush.bf16.msra.mxu0 %v1866
        %1876 = vmatmul.bf16.gmra.mxu0 %v1812
        %v1877 = vpop.f32.mrf.mxu0
        %v1878 = vadd.f32 0.0, %v1877
        %v1879 = vpop.f32.mrf.mxu0
        %v1880 = vadd.f32 0.0, %v1879
        %1881 = vmatmul.bf16.gmra.mxu0 %v1815
        %v1882 = vpop.f32.mrf.mxu0
        %v1883 = vadd.f32 0.0, %v1882
        %v1884 = vpop.f32.mrf.mxu0
        %v1885 = vadd.f32 0.0, %v1884
        %1886 = vmatmul.bf16.gmra.mxu0 %v1818
        %v1887 = vpop.f32.mrf.mxu0
        %v1888 = vadd.f32 0.0, %v1887
        %v1889 = vpop.f32.mrf.mxu0
        %v1890 = vadd.f32 0.0, %v1889
        %1891 = vmatmul.bf16.gmra.mxu0 %v1821
        %v1892 = vpop.f32.mrf.mxu0
        %v1893 = vadd.f32 0.0, %v1892
        %v1894 = vpop.f32.mrf.mxu0
        %v1895 = vadd.f32 0.0, %v1894
        %1896 = vmatmul.bf16.gmra.mxu0 %v1824
        %v1897 = vpop.f32.mrf.mxu0
        %v1898 = vadd.f32 0.0, %v1897
        %v1899 = vpop.f32.mrf.mxu0
        %v1900 = vadd.f32 0.0, %v1899
        %1901 = vmatmul.bf16.gmra.mxu0 %v1827
        %v1902 = vpop.f32.mrf.mxu0
        %v1903 = vadd.f32 0.0, %v1902
        %v1904 = vpop.f32.mrf.mxu0
        %v1905 = vadd.f32 0.0, %v1904
        %1906 = vmatmul.bf16.gmra.mxu0 %v1830
        %v1907 = vpop.f32.mrf.mxu0
        %v1908 = vadd.f32 0.0, %v1907
        %v1909 = vpop.f32.mrf.mxu0
        %v1910 = vadd.f32 0.0, %v1909
        %1911 = vmatmul.bf16.gmra.mxu0 %v1833
        %v1912 = vpop.f32.mrf.mxu0
        %v1913 = vadd.f32 0.0, %v1912
        %v1914 = vpop.f32.mrf.mxu0
        %v1915 = vadd.f32 0.0, %v1914
        %1916 = vmatmul.bf16.gmra.mxu0 %v1836
        %v1917 = vpop.f32.mrf.mxu0
        %v1918 = vadd.f32 0.0, %v1917
        %v1919 = vpop.f32.mrf.mxu0
        %v1920 = vadd.f32 0.0, %v1919
        %1921 = vmatmul.bf16.gmra.mxu0 %v1839
        %v1922 = vpop.f32.mrf.mxu0
        %v1923 = vadd.f32 0.0, %v1922
        %v1924 = vpop.f32.mrf.mxu0
        %v1925 = vadd.f32 0.0, %v1924
        %1926 = vmatmul.bf16.gmra.mxu0 %v1842
        %v1927 = vpop.f32.mrf.mxu0
        %v1928 = vadd.f32 0.0, %v1927
        %v1929 = vpop.f32.mrf.mxu0
        %v1930 = vadd.f32 0.0, %v1929
        %1931 = vmatmul.bf16.gmra.mxu0 %v1845
        %v1932 = vpop.f32.mrf.mxu0
        %v1933 = vadd.f32 0.0, %v1932
        %v1934 = vpop.f32.mrf.mxu0
        %v1935 = vadd.f32 0.0, %v1934
        %1936 = vmatmul.bf16.gmra.mxu0 %v1848
        %v1937 = vpop.f32.mrf.mxu0
        %v1938 = vadd.f32 0.0, %v1937
        %v1939 = vpop.f32.mrf.mxu0
        %v1940 = vadd.f32 0.0, %v1939
        %1941 = vmatmul.bf16.gmra.mxu0 %v1851
        %v1942 = vpop.f32.mrf.mxu0
        %v1943 = vadd.f32 0.0, %v1942
        %v1944 = vpop.f32.mrf.mxu0
        %v1945 = vadd.f32 0.0, %v1944
        %1946 = vmatmul.bf16.gmra.mxu0 %v1854
        %v1947 = vpop.f32.mrf.mxu0
        %v1948 = vadd.f32 0.0, %v1947
        %v1949 = vpop.f32.mrf.mxu0
        %v1950 = vadd.f32 0.0, %v1949
        %1951 = vmatmul.bf16.gmra.mxu0 %v1857
        %v1952 = vpop.f32.mrf.mxu0
        %v1953 = vadd.f32 0.0, %v1952
        %v1954 = vpop.f32.mrf.mxu0
        %v1955 = vadd.f32 0.0, %v1954
        %1956 = vmatmul.bf16.gmra.mxu0 %v1860
        %v1957 = vpop.f32.mrf.mxu0
        %v1958 = vadd.f32 0.0, %v1957
        %v1959 = vpop.f32.mrf.mxu0
        %v1960 = vadd.f32 0.0, %v1959
        %1961 = vmatmul.bf16.gmra.mxu0 %v1863
        %v1962 = vpop.f32.mrf.mxu0
        %v1963 = vadd.f32 0.0, %v1962
        %v1964 = vpop.f32.mrf.mxu0
        %v1965 = vadd.f32 0.0, %v1964
        %1966 = vdwg.mxu0
        %v1967 = vadd.f32 %v1731, %v1878
        %v1968 = vadd.f32 %v1732, %v1880
        %v1969 = vadd.f32 %v1733, %v1883
        %v1970 = vadd.f32 %v1734, %v1885
        %v1971 = vadd.f32 %v1735, %v1888
        %v1972 = vadd.f32 %v1736, %v1890
        %v1973 = vadd.f32 %v1737, %v1893
        %v1974 = vadd.f32 %v1738, %v1895
        %v1975 = vadd.f32 %v1739, %v1898
        %v1976 = vadd.f32 %v1740, %v1900
        %v1977 = vadd.f32 %v1741, %v1903
        %v1978 = vadd.f32 %v1742, %v1905
        %v1979 = vadd.f32 %v1743, %v1908
        %v1980 = vadd.f32 %v1744, %v1910
        %v1981 = vadd.f32 %v1745, %v1913
        %v1982 = vadd.f32 %v1746, %v1915
        %v1983 = vadd.f32 %v1747, %v1918
        %v1984 = vadd.f32 %v1748, %v1920
        %v1985 = vadd.f32 %v1749, %v1923
        %v1986 = vadd.f32 %v1750, %v1925
        %v1987 = vadd.f32 %v1751, %v1928
        %v1988 = vadd.f32 %v1752, %v1930
        %v1989 = vadd.f32 %v1753, %v1933
        %v1990 = vadd.f32 %v1754, %v1935
        %v1991 = vadd.f32 %v1755, %v1938
        %v1992 = vadd.f32 %v1756, %v1940
        %v1993 = vadd.f32 %v1757, %v1943
        %v1994 = vadd.f32 %v1758, %v1945
        %v1995 = vadd.f32 %v1759, %v1948
        %v1996 = vadd.f32 %v1760, %v1950
        %v1997 = vadd.f32 %v1761, %v1953
        %v1998 = vadd.f32 %v1762, %v1955
        %v1999 = vadd.f32 %v1763, %v1958
        %v2000 = vadd.f32 %v1764, %v1960
        %v2001 = vadd.f32 %v1765, %v1963
        %v2002 = vadd.f32 %v1766, %v1965
        %v2003 = vld [vmem:[%s221 + $0x10] sm:$0xc]
        %v2004 = vld [vmem:[%s221 + $0x14] sm:$0xf]
        %v2005 = vld [vmem:[%s221 + $0x18] sm:$0xf]
        %v2006 = vld [vmem:[%s221 + $0x1c] sm:$0xf]
        %v2007 = vld [vmem:[%s221 + $0x20] sm:$0xf]
        %v2008 = vld [vmem:[%s221 + $0x24] sm:$0xf]
        %v2009 = vld [vmem:[%s221 + $0x28] sm:$0xf]
        %v2010 = vld [vmem:[%s221 + $0x2c] sm:$0xf]
        %v2011 = vld [vmem:[%s221 + $0x30] sm:$0xf]
        %v2012 = vld [vmem:[%s221 + $0x34] sm:$0xf]
        %v2013 = vld [vmem:[%s221 + $0x38] sm:$0xf]
        %v2014 = vld [vmem:[%s221 + $0x3c] sm:$0xf]
        %v2015 = vld [vmem:[%s221 + $0x40] sm:$0xf]
        %v2016 = vld [vmem:[%s221 + $0x44] sm:$0xf]
        %v2017 = vld [vmem:[%s221 + $0x48] sm:$0xf]
        %v2018 = vld [vmem:[%s221 + $0x4c] sm:$0xf]
        %v2019 = vld [vmem:[%s221 + $0x50] sm:$0xf]
        %v2020 = vld [vmem:[%s221 + $0x54] sm:$0xf]
        %v2021 = vld [vmem:[%s221 + $0x58] sm:$0xf]
        %v2022 = vld [vmem:[%s221 + $0x5c] sm:$0xf]
        %v2023 = vld [vmem:[%s221 + $0x60] sm:$0xf]
        %v2024 = vld [vmem:[%s221 + $0x64] sm:$0xf]
        %v2025 = vld [vmem:[%s221 + $0x68] sm:$0xf]
        %v2026 = vld [vmem:[%s221 + $0x6c] sm:$0xf]
        %v2027 = vld [vmem:[%s221 + $0x70] sm:$0xf]
        %v2028 = vld [vmem:[%s221 + $0x74] sm:$0xf]
        %v2029 = vld [vmem:[%s221 + $0x78] sm:$0xf]
        %v2030 = vld [vmem:[%s221 + $0x7c] sm:$0xf]
        %v2031 = vld [vmem:[%s221 + $0x80] sm:$0xf]
        %v2032 = vld [vmem:[%s221 + $0x84] sm:$0xf]
        %v2033 = vld [vmem:[%s221 + $0x88] sm:$0xf]
        %v2034 = vld [vmem:[%s221 + $0x8c] sm:$0xf]
        %v2035 = vld [vmem:[%s221 + $0x90] sm:$0xf]
        %v2036 = vld [vmem:[%s221 + $0x94] sm:$0xf]
        %v2037 = vld [vmem:[%s221 + $0x98] sm:$0xf]
        %v2038 = vld [vmem:[%s221 + $0x9c] sm:$0xf]
        %v2039 = vld [vmem:[%s221 + $0xa0] sm:$0x3]
        %s2040 = scalar_lea.vmem %s1, 12
        %v2041 = vld [vmem:[%s2040] sm:$0x3]
        %v2079 = vunpack.c.l.b16 %v2003
        %v2080 = vunpack.c.l.b16 %v2004
        %v2081 = vunpack.c.l.b16 %v2005
        %v2082 = vunpack.c.l.b16 %v2006
        %v2083 = vunpack.c.l.b16 %v2007
        %v2084 = vunpack.c.l.b16 %v2008
        %v2085 = vunpack.c.l.b16 %v2009
        %v2086 = vunpack.c.l.b16 %v2010
        %v2087 = vunpack.c.l.b16 %v2011
        %v2088 = vunpack.c.l.b16 %v2012
        %v2089 = vunpack.c.l.b16 %v2013
        %v2090 = vunpack.c.l.b16 %v2014
        %v2091 = vunpack.c.l.b16 %v2015
        %v2092 = vunpack.c.l.b16 %v2016
        %v2093 = vunpack.c.l.b16 %v2017
        %v2094 = vunpack.c.l.b16 %v2018
        %v2095 = vunpack.c.l.b16 %v2019
        %v2096 = vunpack.c.l.b16 %v2020
        %v2097 = vunpack.c.l.b16 %v2021
        %v2098 = vunpack.c.l.b16 %v2022
        %v2099 = vunpack.c.l.b16 %v2023
        %v2100 = vunpack.c.l.b16 %v2024
        %v2101 = vunpack.c.l.b16 %v2025
        %v2102 = vunpack.c.l.b16 %v2026
        %v2103 = vunpack.c.l.b16 %v2027
        %v2104 = vunpack.c.l.b16 %v2028
        %v2105 = vunpack.c.l.b16 %v2029
        %v2106 = vunpack.c.l.b16 %v2030
        %v2107 = vunpack.c.l.b16 %v2031
        %v2108 = vunpack.c.l.b16 %v2032
        %v2109 = vunpack.c.l.b16 %v2033
        %v2110 = vunpack.c.l.b16 %v2034
        %v2111 = vunpack.c.l.b16 %v2035
        %v2112 = vunpack.c.l.b16 %v2036
        %v2113 = vunpack.c.l.b16 %v2037
        %v2114 = vunpack.c.l.b16 %v2038
        %v2115 = vunpack.c.l.b16 %v2039
        %v2116 = vpack.c.b16 %v2080, %v2079
        %v2117 = vpack.c.b16 %v2082, %v2081
        %v2118 = vpack.c.b16 %v2084, %v2083
        %v2119 = vpack.c.b16 %v2086, %v2085
        %v2120 = vpack.c.b16 %v2088, %v2087
        %v2121 = vpack.c.b16 %v2090, %v2089
        %v2122 = vpack.c.b16 %v2092, %v2091
        %v2123 = vpack.c.b16 %v2094, %v2093
        %v2124 = vpack.c.b16 %v2096, %v2095
        %v2125 = vpack.c.b16 %v2098, %v2097
        %v2126 = vpack.c.b16 %v2100, %v2099
        %v2127 = vpack.c.b16 %v2102, %v2101
        %v2128 = vpack.c.b16 %v2104, %v2103
        %v2129 = vpack.c.b16 %v2106, %v2105
        %v2130 = vpack.c.b16 %v2108, %v2107
        %v2131 = vpack.c.b16 %v2110, %v2109
        %v2132 = vpack.c.b16 %v2112, %v2111
        %v2133 = vpack.c.b16 %v2114, %v2113
        %v2134 = vpack.c.b16 %v2115, %v2115
        %v2135 = vrot.slane %v2116, 2
        %v2136 = vrot.slane %v2117, 2
        %v2137 = vsel %vm1773, %v2135, %v2136
        %v2138 = vrot.slane %v2118, 2
        %v2139 = vsel %vm1773, %v2136, %v2138
        %v2140 = vrot.slane %v2119, 2
        %v2141 = vsel %vm1773, %v2138, %v2140
        %v2142 = vrot.slane %v2120, 2
        %v2143 = vsel %vm1773, %v2140, %v2142
        %v2144 = vrot.slane %v2121, 2
        %v2145 = vsel %vm1773, %v2142, %v2144
        %v2146 = vrot.slane %v2122, 2
        %v2147 = vsel %vm1773, %v2144, %v2146
        %v2148 = vrot.slane %v2123, 2
        %v2149 = vsel %vm1773, %v2146, %v2148
        %v2150 = vrot.slane %v2124, 2
        %v2151 = vsel %vm1773, %v2148, %v2150
        %v2152 = vrot.slane %v2125, 2
        %v2153 = vsel %vm1773, %v2150, %v2152
        %v2154 = vrot.slane %v2126, 2
        %v2155 = vsel %vm1773, %v2152, %v2154
        %v2156 = vrot.slane %v2127, 2
        %v2157 = vsel %vm1773, %v2154, %v2156
        %v2158 = vrot.slane %v2128, 2
        %v2159 = vsel %vm1773, %v2156, %v2158
        %v2160 = vrot.slane %v2129, 2
        %v2161 = vsel %vm1773, %v2158, %v2160
        %v2162 = vrot.slane %v2130, 2
        %v2163 = vsel %vm1773, %v2160, %v2162
        %v2164 = vrot.slane %v2131, 2
        %v2165 = vsel %vm1773, %v2162, %v2164
        %v2166 = vrot.slane %v2132, 2
        %v2167 = vsel %vm1773, %v2164, %v2166
        %v2168 = vrot.slane %v2133, 2
        %v2169 = vsel %vm1773, %v2166, %v2168
        %v2170 = vrot.slane %v2134, 2
        %v2171 = vsel %vm1773, %v2168, %v2170
        %v2173 = vsel %vm505, %v2137, 0
        %v2176 = vsel %vm505, %v2139, 0
        %v2179 = vsel %vm505, %v2141, 0
        %v2182 = vsel %vm505, %v2143, 0
        %v2185 = vsel %vm505, %v2145, 0
        %v2188 = vsel %vm505, %v2147, 0
        %v2191 = vsel %vm505, %v2149, 0
        %v2194 = vsel %vm505, %v2151, 0
        %v2197 = vsel %vm505, %v2153, 0
        %v2200 = vsel %vm505, %v2155, 0
        %v2203 = vsel %vm505, %v2157, 0
        %v2206 = vsel %vm505, %v2159, 0
        %v2209 = vsel %vm505, %v2161, 0
        %v2212 = vsel %vm505, %v2163, 0
        %v2215 = vsel %vm505, %v2165, 0
        %v2218 = vsel %vm505, %v2167, 0
        %v2221 = vsel %vm505, %v2169, 0
        %v2224 = vsel %vm505, %v2171, 0
        %v2227 = vsel %vm560, %v2041, 0
        %2229 = vmatpush.bf16.msra.mxu0 0
        %2230 = vmatpush.bf16.msra.mxu0 0
        %2231 = vmatpush.bf16.msra.mxu0 0
        %2232 = vmatpush.bf16.msra.mxu0 0
        %2233 = vmatpush.bf16.msra.mxu0 0
        %2234 = vmatpush.bf16.msra.mxu0 0
        %2235 = vmatpush.bf16.msra.mxu0 0
        %2236 = vmatpush.bf16.msra.mxu0 %v2227
        %2237 = vmatmul.bf16.gmra.mxu0 %v2173
        %v2238 = vpop.f32.mrf.mxu0
        %v2239 = vadd.f32 0.0, %v2238
        %v2240 = vpop.f32.mrf.mxu0
        %v2241 = vadd.f32 0.0, %v2240
        %2242 = vmatmul.bf16.gmra.mxu0 %v2176
        %v2243 = vpop.f32.mrf.mxu0
        %v2244 = vadd.f32 0.0, %v2243
        %v2245 = vpop.f32.mrf.mxu0
        %v2246 = vadd.f32 0.0, %v2245
        %2247 = vmatmul.bf16.gmra.mxu0 %v2179
        %v2248 = vpop.f32.mrf.mxu0
        %v2249 = vadd.f32 0.0, %v2248
        %v2250 = vpop.f32.mrf.mxu0
        %v2251 = vadd.f32 0.0, %v2250
        %2252 = vmatmul.bf16.gmra.mxu0 %v2182
        %v2253 = vpop.f32.mrf.mxu0
        %v2254 = vadd.f32 0.0, %v2253
        %v2255 = vpop.f32.mrf.mxu0
        %v2256 = vadd.f32 0.0, %v2255
        %2257 = vmatmul.bf16.gmra.mxu0 %v2185
        %v2258 = vpop.f32.mrf.mxu0
        %v2259 = vadd.f32 0.0, %v2258
        %v2260 = vpop.f32.mrf.mxu0
        %v2261 = vadd.f32 0.0, %v2260
        %2262 = vmatmul.bf16.gmra.mxu0 %v2188
        %v2263 = vpop.f32.mrf.mxu0
        %v2264 = vadd.f32 0.0, %v2263
        %v2265 = vpop.f32.mrf.mxu0
        %v2266 = vadd.f32 0.0, %v2265
        %2267 = vmatmul.bf16.gmra.mxu0 %v2191
        %v2268 = vpop.f32.mrf.mxu0
        %v2269 = vadd.f32 0.0, %v2268
        %v2270 = vpop.f32.mrf.mxu0
        %v2271 = vadd.f32 0.0, %v2270
        %2272 = vmatmul.bf16.gmra.mxu0 %v2194
        %v2273 = vpop.f32.mrf.mxu0
        %v2274 = vadd.f32 0.0, %v2273
        %v2275 = vpop.f32.mrf.mxu0
        %v2276 = vadd.f32 0.0, %v2275
        %2277 = vmatmul.bf16.gmra.mxu0 %v2197
        %v2278 = vpop.f32.mrf.mxu0
        %v2279 = vadd.f32 0.0, %v2278
        %v2280 = vpop.f32.mrf.mxu0
        %v2281 = vadd.f32 0.0, %v2280
        %2282 = vmatmul.bf16.gmra.mxu0 %v2200
        %v2283 = vpop.f32.mrf.mxu0
        %v2284 = vadd.f32 0.0, %v2283
        %v2285 = vpop.f32.mrf.mxu0
        %v2286 = vadd.f32 0.0, %v2285
        %2287 = vmatmul.bf16.gmra.mxu0 %v2203
        %v2288 = vpop.f32.mrf.mxu0
        %v2289 = vadd.f32 0.0, %v2288
        %v2290 = vpop.f32.mrf.mxu0
        %v2291 = vadd.f32 0.0, %v2290
        %2292 = vmatmul.bf16.gmra.mxu0 %v2206
        %v2293 = vpop.f32.mrf.mxu0
        %v2294 = vadd.f32 0.0, %v2293
        %v2295 = vpop.f32.mrf.mxu0
        %v2296 = vadd.f32 0.0, %v2295
        %2297 = vmatmul.bf16.gmra.mxu0 %v2209
        %v2298 = vpop.f32.mrf.mxu0
        %v2299 = vadd.f32 0.0, %v2298
        %v2300 = vpop.f32.mrf.mxu0
        %v2301 = vadd.f32 0.0, %v2300
        %2302 = vmatmul.bf16.gmra.mxu0 %v2212
        %v2303 = vpop.f32.mrf.mxu0
        %v2304 = vadd.f32 0.0, %v2303
        %v2305 = vpop.f32.mrf.mxu0
        %v2306 = vadd.f32 0.0, %v2305
        %2307 = vmatmul.bf16.gmra.mxu0 %v2215
        %v2308 = vpop.f32.mrf.mxu0
        %v2309 = vadd.f32 0.0, %v2308
        %v2310 = vpop.f32.mrf.mxu0
        %v2311 = vadd.f32 0.0, %v2310
        %2312 = vmatmul.bf16.gmra.mxu0 %v2218
        %v2313 = vpop.f32.mrf.mxu0
        %v2314 = vadd.f32 0.0, %v2313
        %v2315 = vpop.f32.mrf.mxu0
        %v2316 = vadd.f32 0.0, %v2315
        %2317 = vmatmul.bf16.gmra.mxu0 %v2221
        %v2318 = vpop.f32.mrf.mxu0
        %v2319 = vadd.f32 0.0, %v2318
        %v2320 = vpop.f32.mrf.mxu0
        %v2321 = vadd.f32 0.0, %v2320
        %2322 = vmatmul.bf16.gmra.mxu0 %v2224
        %v2323 = vpop.f32.mrf.mxu0
        %v2324 = vadd.f32 0.0, %v2323
        %v2325 = vpop.f32.mrf.mxu0
        %v2326 = vadd.f32 0.0, %v2325
        %2327 = vdwg.mxu0
        %v2328 = vadd.f32 %v1967, %v2239
        %v2329 = vadd.f32 %v1968, %v2241
        %v2330 = vadd.f32 %v1969, %v2244
        %v2331 = vadd.f32 %v1970, %v2246
        %v2332 = vadd.f32 %v1971, %v2249
        %v2333 = vadd.f32 %v1972, %v2251
        %v2334 = vadd.f32 %v1973, %v2254
        %v2335 = vadd.f32 %v1974, %v2256
        %v2336 = vadd.f32 %v1975, %v2259
        %v2337 = vadd.f32 %v1976, %v2261
        %v2338 = vadd.f32 %v1977, %v2264
        %v2339 = vadd.f32 %v1978, %v2266
        %v2340 = vadd.f32 %v1979, %v2269
        %v2341 = vadd.f32 %v1980, %v2271
        %v2342 = vadd.f32 %v1981, %v2274
        %v2343 = vadd.f32 %v1982, %v2276
        %v2344 = vadd.f32 %v1983, %v2279
        %v2345 = vadd.f32 %v1984, %v2281
        %v2346 = vadd.f32 %v1985, %v2284
        %v2347 = vadd.f32 %v1986, %v2286
        %v2348 = vadd.f32 %v1987, %v2289
        %v2349 = vadd.f32 %v1988, %v2291
        %v2350 = vadd.f32 %v1989, %v2294
        %v2351 = vadd.f32 %v1990, %v2296
        %v2352 = vadd.f32 %v1991, %v2299
        %v2353 = vadd.f32 %v1992, %v2301
        %v2354 = vadd.f32 %v1993, %v2304
        %v2355 = vadd.f32 %v1994, %v2306
        %v2356 = vadd.f32 %v1995, %v2309
        %v2357 = vadd.f32 %v1996, %v2311
        %v2358 = vadd.f32 %v1997, %v2314
        %v2359 = vadd.f32 %v1998, %v2316
        %v2360 = vadd.f32 %v1999, %v2319
        %v2361 = vadd.f32 %v2000, %v2321
        %v2362 = vadd.f32 %v2001, %v2324
        %v2363 = vadd.f32 %v2002, %v2326
        %v2364 = vld [vmem:[%s221 + $0xa0] sm:$0x7]
        %s2365 = scalar_lea.vmem %s1, 14
        %v2366 = vld [vmem:[%s2365] sm:$0x3]
        %v2368 = vunpack.c.l.b16 %v2364
        %v2369 = vpack.c.b16 %v2368, %v2368
        %vm2370 = vsmask.f32 5376
        %v2372 = vshrl.u32 %v2116, 16
        %v2374 = vrot.slane %v2372, 2
        %v2375 = vshll.u32 %v2116, 16
        %v2377 = vrot.slane %v2375, 3
        %v2378 = vor.u32 %v2374, %v2377
        %v2380 = vshrl.u32 %v2117, 16
        %v2382 = vrot.slane %v2380, 2
        %v2383 = vshll.u32 %v2117, 16
        %v2385 = vrot.slane %v2383, 3
        %v2386 = vor.u32 %v2382, %v2385
        %v2387 = vsel %vm2370, %v2378, %v2386
        %v2389 = vshrl.u32 %v2118, 16
        %v2391 = vrot.slane %v2389, 2
        %v2392 = vshll.u32 %v2118, 16
        %v2394 = vrot.slane %v2392, 3
        %v2395 = vor.u32 %v2391, %v2394
        %v2396 = vsel %vm2370, %v2386, %v2395
        %v2398 = vshrl.u32 %v2119, 16
        %v2400 = vrot.slane %v2398, 2
        %v2401 = vshll.u32 %v2119, 16
        %v2403 = vrot.slane %v2401, 3
        %v2404 = vor.u32 %v2400, %v2403
        %v2405 = vsel %vm2370, %v2395, %v2404
        %v2407 = vshrl.u32 %v2120, 16
        %v2409 = vrot.slane %v2407, 2
        %v2410 = vshll.u32 %v2120, 16
        %v2412 = vrot.slane %v2410, 3
        %v2413 = vor.u32 %v2409, %v2412
        %v2414 = vsel %vm2370, %v2404, %v2413
        %v2416 = vshrl.u32 %v2121, 16
        %v2418 = vrot.slane %v2416, 2
        %v2419 = vshll.u32 %v2121, 16
        %v2421 = vrot.slane %v2419, 3
        %v2422 = vor.u32 %v2418, %v2421
        %v2423 = vsel %vm2370, %v2413, %v2422
        %v2425 = vshrl.u32 %v2122, 16
        %v2427 = vrot.slane %v2425, 2
        %v2428 = vshll.u32 %v2122, 16
        %v2430 = vrot.slane %v2428, 3
        %v2431 = vor.u32 %v2427, %v2430
        %v2432 = vsel %vm2370, %v2422, %v2431
        %v2434 = vshrl.u32 %v2123, 16
        %v2436 = vrot.slane %v2434, 2
        %v2437 = vshll.u32 %v2123, 16
        %v2439 = vrot.slane %v2437, 3
        %v2440 = vor.u32 %v2436, %v2439
        %v2441 = vsel %vm2370, %v2431, %v2440
        %v2443 = vshrl.u32 %v2124, 16
        %v2445 = vrot.slane %v2443, 2
        %v2446 = vshll.u32 %v2124, 16
        %v2448 = vrot.slane %v2446, 3
        %v2449 = vor.u32 %v2445, %v2448
        %v2450 = vsel %vm2370, %v2440, %v2449
        %v2452 = vshrl.u32 %v2125, 16
        %v2454 = vrot.slane %v2452, 2
        %v2455 = vshll.u32 %v2125, 16
        %v2457 = vrot.slane %v2455, 3
        %v2458 = vor.u32 %v2454, %v2457
        %v2459 = vsel %vm2370, %v2449, %v2458
        %v2461 = vshrl.u32 %v2126, 16
        %v2463 = vrot.slane %v2461, 2
        %v2464 = vshll.u32 %v2126, 16
        %v2466 = vrot.slane %v2464, 3
        %v2467 = vor.u32 %v2463, %v2466
        %v2468 = vsel %vm2370, %v2458, %v2467
        %v2470 = vshrl.u32 %v2127, 16
        %v2472 = vrot.slane %v2470, 2
        %v2473 = vshll.u32 %v2127, 16
        %v2475 = vrot.slane %v2473, 3
        %v2476 = vor.u32 %v2472, %v2475
        %v2477 = vsel %vm2370, %v2467, %v2476
        %v2479 = vshrl.u32 %v2128, 16
        %v2481 = vrot.slane %v2479, 2
        %v2482 = vshll.u32 %v2128, 16
        %v2484 = vrot.slane %v2482, 3
        %v2485 = vor.u32 %v2481, %v2484
        %v2486 = vsel %vm2370, %v2476, %v2485
        %v2488 = vshrl.u32 %v2129, 16
        %v2490 = vrot.slane %v2488, 2
        %v2491 = vshll.u32 %v2129, 16
        %v2493 = vrot.slane %v2491, 3
        %v2494 = vor.u32 %v2490, %v2493
        %v2495 = vsel %vm2370, %v2485, %v2494
        %v2497 = vshrl.u32 %v2130, 16
        %v2499 = vrot.slane %v2497, 2
        %v2500 = vshll.u32 %v2130, 16
        %v2502 = vrot.slane %v2500, 3
        %v2503 = vor.u32 %v2499, %v2502
        %v2504 = vsel %vm2370, %v2494, %v2503
        %v2506 = vshrl.u32 %v2131, 16
        %v2508 = vrot.slane %v2506, 2
        %v2509 = vshll.u32 %v2131, 16
        %v2511 = vrot.slane %v2509, 3
        %v2512 = vor.u32 %v2508, %v2511
        %v2513 = vsel %vm2370, %v2503, %v2512
        %v2515 = vshrl.u32 %v2132, 16
        %v2517 = vrot.slane %v2515, 2
        %v2518 = vshll.u32 %v2132, 16
        %v2520 = vrot.slane %v2518, 3
        %v2521 = vor.u32 %v2517, %v2520
        %v2522 = vsel %vm2370, %v2512, %v2521
        %v2524 = vshrl.u32 %v2133, 16
        %v2526 = vrot.slane %v2524, 2
        %v2527 = vshll.u32 %v2133, 16
        %v2529 = vrot.slane %v2527, 3
        %v2530 = vor.u32 %v2526, %v2529
        %v2531 = vsel %vm2370, %v2521, %v2530
        %v2533 = vshrl.u32 %v2369, 16
        %v2535 = vrot.slane %v2533, 2
        %v2536 = vshll.u32 %v2369, 16
        %v2538 = vrot.slane %v2536, 3
        %v2539 = vor.u32 %v2535, %v2538
        %v2540 = vsel %vm2370, %v2530, %v2539
        %v2542 = vsel %vm505, %v2387, 0
        %v2545 = vsel %vm505, %v2396, 0
        %v2548 = vsel %vm505, %v2405, 0
        %v2551 = vsel %vm505, %v2414, 0
        %v2554 = vsel %vm505, %v2423, 0
        %v2557 = vsel %vm505, %v2432, 0
        %v2560 = vsel %vm505, %v2441, 0
        %v2563 = vsel %vm505, %v2450, 0
        %v2566 = vsel %vm505, %v2459, 0
        %v2569 = vsel %vm505, %v2468, 0
        %v2572 = vsel %vm505, %v2477, 0
        %v2575 = vsel %vm505, %v2486, 0
        %v2578 = vsel %vm505, %v2495, 0
        %v2581 = vsel %vm505, %v2504, 0
        %v2584 = vsel %vm505, %v2513, 0
        %v2587 = vsel %vm505, %v2522, 0
        %v2590 = vsel %vm505, %v2531, 0
        %v2593 = vsel %vm505, %v2540, 0
        %v2596 = vsel %vm560, %v2366, 0
        %2598 = vmatpush.bf16.msra.mxu0 0
        %2599 = vmatpush.bf16.msra.mxu0 0
        %2600 = vmatpush.bf16.msra.mxu0 0
        %2601 = vmatpush.bf16.msra.mxu0 0
        %2602 = vmatpush.bf16.msra.mxu0 0
        %2603 = vmatpush.bf16.msra.mxu0 0
        %2604 = vmatpush.bf16.msra.mxu0 0
        %2605 = vmatpush.bf16.msra.mxu0 %v2596
        %2606 = vmatmul.bf16.gmra.mxu0 %v2542
        %v2607 = vpop.f32.mrf.mxu0
        %v2608 = vadd.f32 0.0, %v2607
        %v2609 = vpop.f32.mrf.mxu0
        %v2610 = vadd.f32 0.0, %v2609
        %2611 = vmatmul.bf16.gmra.mxu0 %v2545
        %v2612 = vpop.f32.mrf.mxu0
        %v2613 = vadd.f32 0.0, %v2612
        %v2614 = vpop.f32.mrf.mxu0
        %v2615 = vadd.f32 0.0, %v2614
        %2616 = vmatmul.bf16.gmra.mxu0 %v2548
        %v2617 = vpop.f32.mrf.mxu0
        %v2618 = vadd.f32 0.0, %v2617
        %v2619 = vpop.f32.mrf.mxu0
        %v2620 = vadd.f32 0.0, %v2619
        %2621 = vmatmul.bf16.gmra.mxu0 %v2551
        %v2622 = vpop.f32.mrf.mxu0
        %v2623 = vadd.f32 0.0, %v2622
        %v2624 = vpop.f32.mrf.mxu0
        %v2625 = vadd.f32 0.0, %v2624
        %2626 = vmatmul.bf16.gmra.mxu0 %v2554
        %v2627 = vpop.f32.mrf.mxu0
        %v2628 = vadd.f32 0.0, %v2627
        %v2629 = vpop.f32.mrf.mxu0
        %v2630 = vadd.f32 0.0, %v2629
        %2631 = vmatmul.bf16.gmra.mxu0 %v2557
        %v2632 = vpop.f32.mrf.mxu0
        %v2633 = vadd.f32 0.0, %v2632
        %v2634 = vpop.f32.mrf.mxu0
        %v2635 = vadd.f32 0.0, %v2634
        %2636 = vmatmul.bf16.gmra.mxu0 %v2560
        %v2637 = vpop.f32.mrf.mxu0
        %v2638 = vadd.f32 0.0, %v2637
        %v2639 = vpop.f32.mrf.mxu0
        %v2640 = vadd.f32 0.0, %v2639
        %2641 = vmatmul.bf16.gmra.mxu0 %v2563
        %v2642 = vpop.f32.mrf.mxu0
        %v2643 = vadd.f32 0.0, %v2642
        %v2644 = vpop.f32.mrf.mxu0
        %v2645 = vadd.f32 0.0, %v2644
        %2646 = vmatmul.bf16.gmra.mxu0 %v2566
        %v2647 = vpop.f32.mrf.mxu0
        %v2648 = vadd.f32 0.0, %v2647
        %v2649 = vpop.f32.mrf.mxu0
        %v2650 = vadd.f32 0.0, %v2649
        %2651 = vmatmul.bf16.gmra.mxu0 %v2569
        %v2652 = vpop.f32.mrf.mxu0
        %v2653 = vadd.f32 0.0, %v2652
        %v2654 = vpop.f32.mrf.mxu0
        %v2655 = vadd.f32 0.0, %v2654
        %2656 = vmatmul.bf16.gmra.mxu0 %v2572
        %v2657 = vpop.f32.mrf.mxu0
        %v2658 = vadd.f32 0.0, %v2657
        %v2659 = vpop.f32.mrf.mxu0
        %v2660 = vadd.f32 0.0, %v2659
        %2661 = vmatmul.bf16.gmra.mxu0 %v2575
        %v2662 = vpop.f32.mrf.mxu0
        %v2663 = vadd.f32 0.0, %v2662
        %v2664 = vpop.f32.mrf.mxu0
        %v2665 = vadd.f32 0.0, %v2664
        %2666 = vmatmul.bf16.gmra.mxu0 %v2578
        %v2667 = vpop.f32.mrf.mxu0
        %v2668 = vadd.f32 0.0, %v2667
        %v2669 = vpop.f32.mrf.mxu0
        %v2670 = vadd.f32 0.0, %v2669
        %2671 = vmatmul.bf16.gmra.mxu0 %v2581
        %v2672 = vpop.f32.mrf.mxu0
        %v2673 = vadd.f32 0.0, %v2672
        %v2674 = vpop.f32.mrf.mxu0
        %v2675 = vadd.f32 0.0, %v2674
        %2676 = vmatmul.bf16.gmra.mxu0 %v2584
        %v2677 = vpop.f32.mrf.mxu0
        %v2678 = vadd.f32 0.0, %v2677
        %v2679 = vpop.f32.mrf.mxu0
        %v2680 = vadd.f32 0.0, %v2679
        %2681 = vmatmul.bf16.gmra.mxu0 %v2587
        %v2682 = vpop.f32.mrf.mxu0
        %v2683 = vadd.f32 0.0, %v2682
        %v2684 = vpop.f32.mrf.mxu0
        %v2685 = vadd.f32 0.0, %v2684
        %2686 = vmatmul.bf16.gmra.mxu0 %v2590
        %v2687 = vpop.f32.mrf.mxu0
        %v2688 = vadd.f32 0.0, %v2687
        %v2689 = vpop.f32.mrf.mxu0
        %v2690 = vadd.f32 0.0, %v2689
        %2691 = vmatmul.bf16.gmra.mxu0 %v2593
        %v2692 = vpop.f32.mrf.mxu0
        %v2693 = vadd.f32 0.0, %v2692
        %v2694 = vpop.f32.mrf.mxu0
        %v2695 = vadd.f32 0.0, %v2694
        %2696 = vdwg.mxu0
        %v2697 = vadd.f32 %v2328, %v2608
        %v2698 = vadd.f32 %v2329, %v2610
        %v2699 = vadd.f32 %v2330, %v2613
        %v2700 = vadd.f32 %v2331, %v2615
        %v2701 = vadd.f32 %v2332, %v2618
        %v2702 = vadd.f32 %v2333, %v2620
        %v2703 = vadd.f32 %v2334, %v2623
        %v2704 = vadd.f32 %v2335, %v2625
        %v2705 = vadd.f32 %v2336, %v2628
        %v2706 = vadd.f32 %v2337, %v2630
        %v2707 = vadd.f32 %v2338, %v2633
        %v2708 = vadd.f32 %v2339, %v2635
        %v2709 = vadd.f32 %v2340, %v2638
        %v2710 = vadd.f32 %v2341, %v2640
        %v2711 = vadd.f32 %v2342, %v2643
        %v2712 = vadd.f32 %v2343, %v2645
        %v2713 = vadd.f32 %v2344, %v2648
        %v2714 = vadd.f32 %v2345, %v2650
        %v2715 = vadd.f32 %v2346, %v2653
        %v2716 = vadd.f32 %v2347, %v2655
        %v2717 = vadd.f32 %v2348, %v2658
        %v2718 = vadd.f32 %v2349, %v2660
        %v2719 = vadd.f32 %v2350, %v2663
        %v2720 = vadd.f32 %v2351, %v2665
        %v2721 = vadd.f32 %v2352, %v2668
        %v2722 = vadd.f32 %v2353, %v2670
        %v2723 = vadd.f32 %v2354, %v2673
        %v2724 = vadd.f32 %v2355, %v2675
        %v2725 = vadd.f32 %v2356, %v2678
        %v2726 = vadd.f32 %v2357, %v2680
        %v2727 = vadd.f32 %v2358, %v2683
        %v2728 = vadd.f32 %v2359, %v2685
        %v2729 = vadd.f32 %v2360, %v2688
        %v2730 = vadd.f32 %v2361, %v2690
        %v2731 = vadd.f32 %v2362, %v2693
        %v2732 = vadd.f32 %v2363, %v2695
        %v2733 = vld [vmem:[%s221 + $0x10] sm:$0x8]
        %s2734 = scalar_lea.vmem %s1, 16
        %v2735 = vld [vmem:[%s2734] sm:$0x3]
        %v2737 = vunpack.c.l.b16 %v2733
        %v2738 = vpack.c.b16 %v2080, %v2737
        %vm2739 = vcmask 1044480
        %v2740 = vrot.slane %v2738, 3
        %v2741 = vrot.slane %v2117, 3
        %v2742 = vsel %vm2739, %v2740, %v2741
        %v2743 = vrot.slane %v2118, 3
        %v2744 = vsel %vm2739, %v2741, %v2743
        %v2745 = vrot.slane %v2119, 3
        %v2746 = vsel %vm2739, %v2743, %v2745
        %v2747 = vrot.slane %v2120, 3
        %v2748 = vsel %vm2739, %v2745, %v2747
        %v2749 = vrot.slane %v2121, 3
        %v2750 = vsel %vm2739, %v2747, %v2749
        %v2751 = vrot.slane %v2122, 3
        %v2752 = vsel %vm2739, %v2749, %v2751
        %v2753 = vrot.slane %v2123, 3
        %v2754 = vsel %vm2739, %v2751, %v2753
        %v2755 = vrot.slane %v2124, 3
        %v2756 = vsel %vm2739, %v2753, %v2755
        %v2757 = vrot.slane %v2125, 3
        %v2758 = vsel %vm2739, %v2755, %v2757
        %v2759 = vrot.slane %v2126, 3
        %v2760 = vsel %vm2739, %v2757, %v2759
        %v2761 = vrot.slane %v2127, 3
        %v2762 = vsel %vm2739, %v2759, %v2761
        %v2763 = vrot.slane %v2128, 3
        %v2764 = vsel %vm2739, %v2761, %v2763
        %v2765 = vrot.slane %v2129, 3
        %v2766 = vsel %vm2739, %v2763, %v2765
        %v2767 = vrot.slane %v2130, 3
        %v2768 = vsel %vm2739, %v2765, %v2767
        %v2769 = vrot.slane %v2131, 3
        %v2770 = vsel %vm2739, %v2767, %v2769
        %v2771 = vrot.slane %v2132, 3
        %v2772 = vsel %vm2739, %v2769, %v2771
        %v2773 = vrot.slane %v2133, 3
        %v2774 = vsel %vm2739, %v2771, %v2773
        %v2775 = vrot.slane %v2369, 3
        %v2776 = vsel %vm2739, %v2773, %v2775
        %v2778 = vsel %vm505, %v2742, 0
        %v2781 = vsel %vm505, %v2744, 0
        %v2784 = vsel %vm505, %v2746, 0
        %v2787 = vsel %vm505, %v2748, 0
        %v2790 = vsel %vm505, %v2750, 0
        %v2793 = vsel %vm505, %v2752, 0
        %v2796 = vsel %vm505, %v2754, 0
        %v2799 = vsel %vm505, %v2756, 0
        %v2802 = vsel %vm505, %v2758, 0
        %v2805 = vsel %vm505, %v2760, 0
        %v2808 = vsel %vm505, %v2762, 0
        %v2811 = vsel %vm505, %v2764, 0
        %v2814 = vsel %vm505, %v2766, 0
        %v2817 = vsel %vm505, %v2768, 0
        %v2820 = vsel %vm505, %v2770, 0
        %v2823 = vsel %vm505, %v2772, 0
        %v2826 = vsel %vm505, %v2774, 0
        %v2829 = vsel %vm505, %v2776, 0
        %v2832 = vsel %vm560, %v2735, 0
        %2834 = vmatpush.bf16.msra.mxu0 0
        %2835 = vmatpush.bf16.msra.mxu0 0
        %2836 = vmatpush.bf16.msra.mxu0 0
        %2837 = vmatpush.bf16.msra.mxu0 0
        %2838 = vmatpush.bf16.msra.mxu0 0
        %2839 = vmatpush.bf16.msra.mxu0 0
        %2840 = vmatpush.bf16.msra.mxu0 0
        %2841 = vmatpush.bf16.msra.mxu0 %v2832
        %2842 = vmatmul.bf16.gmra.mxu0 %v2778
        %v2843 = vpop.f32.mrf.mxu0
        %v2844 = vadd.f32 0.0, %v2843
        %v2845 = vpop.f32.mrf.mxu0
        %v2846 = vadd.f32 0.0, %v2845
        %2847 = vmatmul.bf16.gmra.mxu0 %v2781
        %v2848 = vpop.f32.mrf.mxu0
        %v2849 = vadd.f32 0.0, %v2848
        %v2850 = vpop.f32.mrf.mxu0
        %v2851 = vadd.f32 0.0, %v2850
        %2852 = vmatmul.bf16.gmra.mxu0 %v2784
        %v2853 = vpop.f32.mrf.mxu0
        %v2854 = vadd.f32 0.0, %v2853
        %v2855 = vpop.f32.mrf.mxu0
        %v2856 = vadd.f32 0.0, %v2855
        %2857 = vmatmul.bf16.gmra.mxu0 %v2787
        %v2858 = vpop.f32.mrf.mxu0
        %v2859 = vadd.f32 0.0, %v2858
        %v2860 = vpop.f32.mrf.mxu0
        %v2861 = vadd.f32 0.0, %v2860
        %2862 = vmatmul.bf16.gmra.mxu0 %v2790
        %v2863 = vpop.f32.mrf.mxu0
        %v2864 = vadd.f32 0.0, %v2863
        %v2865 = vpop.f32.mrf.mxu0
        %v2866 = vadd.f32 0.0, %v2865
        %2867 = vmatmul.bf16.gmra.mxu0 %v2793
        %v2868 = vpop.f32.mrf.mxu0
        %v2869 = vadd.f32 0.0, %v2868
        %v2870 = vpop.f32.mrf.mxu0
        %v2871 = vadd.f32 0.0, %v2870
        %2872 = vmatmul.bf16.gmra.mxu0 %v2796
        %v2873 = vpop.f32.mrf.mxu0
        %v2874 = vadd.f32 0.0, %v2873
        %v2875 = vpop.f32.mrf.mxu0
        %v2876 = vadd.f32 0.0, %v2875
        %2877 = vmatmul.bf16.gmra.mxu0 %v2799
        %v2878 = vpop.f32.mrf.mxu0
        %v2879 = vadd.f32 0.0, %v2878
        %v2880 = vpop.f32.mrf.mxu0
        %v2881 = vadd.f32 0.0, %v2880
        %2882 = vmatmul.bf16.gmra.mxu0 %v2802
        %v2883 = vpop.f32.mrf.mxu0
        %v2884 = vadd.f32 0.0, %v2883
        %v2885 = vpop.f32.mrf.mxu0
        %v2886 = vadd.f32 0.0, %v2885
        %2887 = vmatmul.bf16.gmra.mxu0 %v2805
        %v2888 = vpop.f32.mrf.mxu0
        %v2889 = vadd.f32 0.0, %v2888
        %v2890 = vpop.f32.mrf.mxu0
        %v2891 = vadd.f32 0.0, %v2890
        %2892 = vmatmul.bf16.gmra.mxu0 %v2808
        %v2893 = vpop.f32.mrf.mxu0
        %v2894 = vadd.f32 0.0, %v2893
        %v2895 = vpop.f32.mrf.mxu0
        %v2896 = vadd.f32 0.0, %v2895
        %2897 = vmatmul.bf16.gmra.mxu0 %v2811
        %v2898 = vpop.f32.mrf.mxu0
        %v2899 = vadd.f32 0.0, %v2898
        %v2900 = vpop.f32.mrf.mxu0
        %v2901 = vadd.f32 0.0, %v2900
        %2902 = vmatmul.bf16.gmra.mxu0 %v2814
        %v2903 = vpop.f32.mrf.mxu0
        %v2904 = vadd.f32 0.0, %v2903
        %v2905 = vpop.f32.mrf.mxu0
        %v2906 = vadd.f32 0.0, %v2905
        %2907 = vmatmul.bf16.gmra.mxu0 %v2817
        %v2908 = vpop.f32.mrf.mxu0
        %v2909 = vadd.f32 0.0, %v2908
        %v2910 = vpop.f32.mrf.mxu0
        %v2911 = vadd.f32 0.0, %v2910
        %2912 = vmatmul.bf16.gmra.mxu0 %v2820
        %v2913 = vpop.f32.mrf.mxu0
        %v2914 = vadd.f32 0.0, %v2913
        %v2915 = vpop.f32.mrf.mxu0
        %v2916 = vadd.f32 0.0, %v2915
        %2917 = vmatmul.bf16.gmra.mxu0 %v2823
        %v2918 = vpop.f32.mrf.mxu0
        %v2919 = vadd.f32 0.0, %v2918
        %v2920 = vpop.f32.mrf.mxu0
        %v2921 = vadd.f32 0.0, %v2920
        %2922 = vmatmul.bf16.gmra.mxu0 %v2826
        %v2923 = vpop.f32.mrf.mxu0
        %v2924 = vadd.f32 0.0, %v2923
        %v2925 = vpop.f32.mrf.mxu0
        %v2926 = vadd.f32 0.0, %v2925
        %2927 = vmatmul.bf16.gmra.mxu0 %v2829
        %v2928 = vpop.f32.mrf.mxu0
        %v2929 = vadd.f32 0.0, %v2928
        %v2930 = vpop.f32.mrf.mxu0
        %v2931 = vadd.f32 0.0, %v2930
        %2932 = vdwg.mxu0
        %v2933 = vadd.f32 %v2697, %v2844
        %v2934 = vadd.f32 %v2698, %v2846
        %v2935 = vadd.f32 %v2699, %v2849
        %v2936 = vadd.f32 %v2700, %v2851
        %v2937 = vadd.f32 %v2701, %v2854
        %v2938 = vadd.f32 %v2702, %v2856
        %v2939 = vadd.f32 %v2703, %v2859
        %v2940 = vadd.f32 %v2704, %v2861
        %v2941 = vadd.f32 %v2705, %v2864
        %v2942 = vadd.f32 %v2706, %v2866
        %v2943 = vadd.f32 %v2707, %v2869
        %v2944 = vadd.f32 %v2708, %v2871
        %v2945 = vadd.f32 %v2709, %v2874
        %v2946 = vadd.f32 %v2710, %v2876
        %v2947 = vadd.f32 %v2711, %v2879
        %v2948 = vadd.f32 %v2712, %v2881
        %v2949 = vadd.f32 %v2713, %v2884
        %v2950 = vadd.f32 %v2714, %v2886
        %v2951 = vadd.f32 %v2715, %v2889
        %v2952 = vadd.f32 %v2716, %v2891
        %v2953 = vadd.f32 %v2717, %v2894
        %v2954 = vadd.f32 %v2718, %v2896
        %v2955 = vadd.f32 %v2719, %v2899
        %v2956 = vadd.f32 %v2720, %v2901
        %v2957 = vadd.f32 %v2721, %v2904
        %v2958 = vadd.f32 %v2722, %v2906
        %v2959 = vadd.f32 %v2723, %v2909
        %v2960 = vadd.f32 %v2724, %v2911
        %v2961 = vadd.f32 %v2725, %v2914
        %v2962 = vadd.f32 %v2726, %v2916
        %v2963 = vadd.f32 %v2727, %v2919
        %v2964 = vadd.f32 %v2728, %v2921
        %v2965 = vadd.f32 %v2729, %v2924
        %v2966 = vadd.f32 %v2730, %v2926
        %v2967 = vadd.f32 %v2731, %v2929
        %v2968 = vadd.f32 %v2732, %v2931
        %v2969 = vmax.f32 %v2933, 0.0
        %v2970 = vmax.f32 %v2934, 0.0
        %v2971 = vmax.f32 %v2935, 0.0
        %v2972 = vmax.f32 %v2936, 0.0
        %v2973 = vmax.f32 %v2937, 0.0
        %v2974 = vmax.f32 %v2938, 0.0
        %v2975 = vmax.f32 %v2939, 0.0
        %v2976 = vmax.f32 %v2940, 0.0
        %v2977 = vmax.f32 %v2941, 0.0
        %v2978 = vmax.f32 %v2942, 0.0
        %v2979 = vmax.f32 %v2943, 0.0
        %v2980 = vmax.f32 %v2944, 0.0
        %v2981 = vmax.f32 %v2945, 0.0
        %v2982 = vmax.f32 %v2946, 0.0
        %v2983 = vmax.f32 %v2947, 0.0
        %v2984 = vmax.f32 %v2948, 0.0
        %v2985 = vmax.f32 %v2949, 0.0
        %v2986 = vmax.f32 %v2950, 0.0
        %v2987 = vmax.f32 %v2951, 0.0
        %v2988 = vmax.f32 %v2952, 0.0
        %v2989 = vmax.f32 %v2953, 0.0
        %v2990 = vmax.f32 %v2954, 0.0
        %v2991 = vmax.f32 %v2955, 0.0
        %v2992 = vmax.f32 %v2956, 0.0
        %v2993 = vmax.f32 %v2957, 0.0
        %v2994 = vmax.f32 %v2958, 0.0
        %v2995 = vmax.f32 %v2959, 0.0
        %v2996 = vmax.f32 %v2960, 0.0
        %v2997 = vmax.f32 %v2961, 0.0
        %v2998 = vmax.f32 %v2962, 0.0
        %v2999 = vmax.f32 %v2963, 0.0
        %v3000 = vmax.f32 %v2964, 0.0
        %v3001 = vmax.f32 %v2965, 0.0
        %v3002 = vmax.f32 %v2966, 0.0
        %v3003 = vmax.f32 %v2967, 0.0
        %v3004 = vmax.f32 %v2968, 0.0
        %v3005 = vld [vmem:[%s2] sm:$0xff]
        %v3006 = vld [vmem:[%s2 + $0x8] sm:$0xff]
        %v3007 = vld [vmem:[%s2 + $0x10] sm:$0xff]
        %v3008 = vld [vmem:[%s2 + $0x18] sm:$0xff]
        %v3009 = vld [vmem:[%s2 + $0x20] sm:$0xff]
        %v3010 = vld [vmem:[%s2 + $0x28] sm:$0xff]
        %v3011 = vld [vmem:[%s2 + $0x30] sm:$0xff]
        %v3012 = vld [vmem:[%s2 + $0x38] sm:$0xff]
        %v3013 = vld [vmem:[%s2 + $0x40] sm:$0xff]
        %v3014 = vld [vmem:[%s2 + $0x48] sm:$0xff]
        %v3015 = vld [vmem:[%s2 + $0x50] sm:$0xff]
        %v3016 = vld [vmem:[%s2 + $0x58] sm:$0xff]
        %v3017 = vld [vmem:[%s2 + $0x60] sm:$0xff]
        %v3018 = vld [vmem:[%s2 + $0x68] sm:$0xff]
        %v3019 = vld [vmem:[%s2 + $0x70] sm:$0xff]
        %v3020 = vld [vmem:[%s2 + $0x78] sm:$0xff]
        %v3021 = vld [vmem:[%s2 + $0x80] sm:$0xff]
        %v3022 = vld [vmem:[%s2 + $0x88] sm:$0xff]
        %v3023 = vld [vmem:[%s2 + $0x90] sm:$0xff]
        %v3024 = vld [vmem:[%s2 + $0x98] sm:$0xff]
        %v3025 = vld [vmem:[%s2 + $0xa0] sm:$0xff]
        %v3026 = vld [vmem:[%s2 + $0xa8] sm:$0xff]
        %v3027 = vld [vmem:[%s2 + $0xb0] sm:$0xff]
        %v3028 = vld [vmem:[%s2 + $0xb8] sm:$0xff]
        %v3029 = vld [vmem:[%s2 + $0xc0] sm:$0xff]
        %v3030 = vld [vmem:[%s2 + $0xc8] sm:$0xff]
        %v3031 = vld [vmem:[%s2 + $0xd0] sm:$0xff]
        %v3032 = vld [vmem:[%s2 + $0xd8] sm:$0xff]
        %v3033 = vld [vmem:[%s2 + $0xe0] sm:$0xff]
        %v3034 = vld [vmem:[%s2 + $0xe8] sm:$0xff]
        %v3035 = vld [vmem:[%s2 + $0xf0] sm:$0xff]
        %v3036 = vld [vmem:[%s2 + $0xf8] sm:$0xff]
        %v3037 = vld [vmem:[%s2 + $0x100] sm:$0xff]
        %v3038 = vld [vmem:[%s2 + $0x108] sm:$0xff]
        %v3039 = vld [vmem:[%s2 + $0x110] sm:$0xff]
        %v3040 = vld [vmem:[%s2 + $0x118] sm:$0xff]
        %3042 = vset.pattern.permute.xlu0 0
        %3043 = vperm.xlu0 %3042, %v3005
        %v3044 = vpop.permute.xlu0 %3043
        %3047 = vset.pattern.permute.xlu0 0
        %3048 = vperm.xlu0 %3047, %v3006
        %v3049 = vpop.permute.xlu0 %3048
        %3052 = vset.pattern.permute.xlu0 0
        %3053 = vperm.xlu0 %3052, %v3007
        %v3054 = vpop.permute.xlu0 %3053
        %3057 = vset.pattern.permute.xlu0 0
        %3058 = vperm.xlu0 %3057, %v3008
        %v3059 = vpop.permute.xlu0 %3058
        %3062 = vset.pattern.permute.xlu0 0
        %3063 = vperm.xlu0 %3062, %v3009
        %v3064 = vpop.permute.xlu0 %3063
        %3067 = vset.pattern.permute.xlu0 0
        %3068 = vperm.xlu0 %3067, %v3010
        %v3069 = vpop.permute.xlu0 %3068
        %3072 = vset.pattern.permute.xlu0 0
        %3073 = vperm.xlu0 %3072, %v3011
        %v3074 = vpop.permute.xlu0 %3073
        %3077 = vset.pattern.permute.xlu0 0
        %3078 = vperm.xlu0 %3077, %v3012
        %v3079 = vpop.permute.xlu0 %3078
        %3082 = vset.pattern.permute.xlu0 0
        %3083 = vperm.xlu0 %3082, %v3013
        %v3084 = vpop.permute.xlu0 %3083
        %3087 = vset.pattern.permute.xlu0 0
        %3088 = vperm.xlu0 %3087, %v3014
        %v3089 = vpop.permute.xlu0 %3088
        %3092 = vset.pattern.permute.xlu0 0
        %3093 = vperm.xlu0 %3092, %v3015
        %v3094 = vpop.permute.xlu0 %3093
        %3097 = vset.pattern.permute.xlu0 0
        %3098 = vperm.xlu0 %3097, %v3016
        %v3099 = vpop.permute.xlu0 %3098
        %3102 = vset.pattern.permute.xlu0 0
        %3103 = vperm.xlu0 %3102, %v3017
        %v3104 = vpop.permute.xlu0 %3103
        %3107 = vset.pattern.permute.xlu0 0
        %3108 = vperm.xlu0 %3107, %v3018
        %v3109 = vpop.permute.xlu0 %3108
        %3112 = vset.pattern.permute.xlu0 0
        %3113 = vperm.xlu0 %3112, %v3019
        %v3114 = vpop.permute.xlu0 %3113
        %3117 = vset.pattern.permute.xlu0 0
        %3118 = vperm.xlu0 %3117, %v3020
        %v3119 = vpop.permute.xlu0 %3118
        %3122 = vset.pattern.permute.xlu0 0
        %3123 = vperm.xlu0 %3122, %v3021
        %v3124 = vpop.permute.xlu0 %3123
        %3127 = vset.pattern.permute.xlu0 0
        %3128 = vperm.xlu0 %3127, %v3022
        %v3129 = vpop.permute.xlu0 %3128
        %3132 = vset.pattern.permute.xlu0 0
        %3133 = vperm.xlu0 %3132, %v3023
        %v3134 = vpop.permute.xlu0 %3133
        %3137 = vset.pattern.permute.xlu0 0
        %3138 = vperm.xlu0 %3137, %v3024
        %v3139 = vpop.permute.xlu0 %3138
        %3142 = vset.pattern.permute.xlu0 0
        %3143 = vperm.xlu0 %3142, %v3025
        %v3144 = vpop.permute.xlu0 %3143
        %3147 = vset.pattern.permute.xlu0 0
        %3148 = vperm.xlu0 %3147, %v3026
        %v3149 = vpop.permute.xlu0 %3148
        %3152 = vset.pattern.permute.xlu0 0
        %3153 = vperm.xlu0 %3152, %v3027
        %v3154 = vpop.permute.xlu0 %3153
        %3157 = vset.pattern.permute.xlu0 0
        %3158 = vperm.xlu0 %3157, %v3028
        %v3159 = vpop.permute.xlu0 %3158
        %3162 = vset.pattern.permute.xlu0 0
        %3163 = vperm.xlu0 %3162, %v3029
        %v3164 = vpop.permute.xlu0 %3163
        %3167 = vset.pattern.permute.xlu0 0
        %3168 = vperm.xlu0 %3167, %v3030
        %v3169 = vpop.permute.xlu0 %3168
        %3172 = vset.pattern.permute.xlu0 0
        %3173 = vperm.xlu0 %3172, %v3031
        %v3174 = vpop.permute.xlu0 %3173
        %3177 = vset.pattern.permute.xlu0 0
        %3178 = vperm.xlu0 %3177, %v3032
        %v3179 = vpop.permute.xlu0 %3178
        %3182 = vset.pattern.permute.xlu0 0
        %3183 = vperm.xlu0 %3182, %v3033
        %v3184 = vpop.permute.xlu0 %3183
        %3187 = vset.pattern.permute.xlu0 0
        %3188 = vperm.xlu0 %3187, %v3034
        %v3189 = vpop.permute.xlu0 %3188
        %3192 = vset.pattern.permute.xlu0 0
        %3193 = vperm.xlu0 %3192, %v3035
        %v3194 = vpop.permute.xlu0 %3193
        %3197 = vset.pattern.permute.xlu0 0
        %3198 = vperm.xlu0 %3197, %v3036
        %v3199 = vpop.permute.xlu0 %3198
        %3202 = vset.pattern.permute.xlu0 0
        %3203 = vperm.xlu0 %3202, %v3037
        %v3204 = vpop.permute.xlu0 %3203
        %3207 = vset.pattern.permute.xlu0 0
        %3208 = vperm.xlu0 %3207, %v3038
        %v3209 = vpop.permute.xlu0 %3208
        %3212 = vset.pattern.permute.xlu0 0
        %3213 = vperm.xlu0 %3212, %v3039
        %v3214 = vpop.permute.xlu0 %3213
        %3217 = vset.pattern.permute.xlu0 0
        %3218 = vperm.xlu0 %3217, %v3040
        %v3219 = vpop.permute.xlu0 %3218
        %v3221 = vmul.f32 %v2969, %v3044
        %v3222 = vmul.f32 %v2970, %v3049
        %v3223 = vmul.f32 %v2971, %v3054
        %v3224 = vmul.f32 %v2972, %v3059
        %v3225 = vmul.f32 %v2973, %v3064
        %v3226 = vmul.f32 %v2974, %v3069
        %v3227 = vmul.f32 %v2975, %v3074
        %v3228 = vmul.f32 %v2976, %v3079
        %v3229 = vmul.f32 %v2977, %v3084
        %v3230 = vmul.f32 %v2978, %v3089
        %v3231 = vmul.f32 %v2979, %v3094
        %v3232 = vmul.f32 %v2980, %v3099
        %v3233 = vmul.f32 %v2981, %v3104
        %v3234 = vmul.f32 %v2982, %v3109
        %v3235 = vmul.f32 %v2983, %v3114
        %v3236 = vmul.f32 %v2984, %v3119
        %v3237 = vmul.f32 %v2985, %v3124
        %v3238 = vmul.f32 %v2986, %v3129
        %v3239 = vmul.f32 %v2987, %v3134
        %v3240 = vmul.f32 %v2988, %v3139
        %v3241 = vmul.f32 %v2989, %v3144
        %v3242 = vmul.f32 %v2990, %v3149
        %v3243 = vmul.f32 %v2991, %v3154
        %v3244 = vmul.f32 %v2992, %v3159
        %v3245 = vmul.f32 %v2993, %v3164
        %v3246 = vmul.f32 %v2994, %v3169
        %v3247 = vmul.f32 %v2995, %v3174
        %v3248 = vmul.f32 %v2996, %v3179
        %v3249 = vmul.f32 %v2997, %v3184
        %v3250 = vmul.f32 %v2998, %v3189
        %v3251 = vmul.f32 %v2999, %v3194
        %v3252 = vmul.f32 %v3000, %v3199
        %v3253 = vmul.f32 %v3001, %v3204
        %v3254 = vmul.f32 %v3002, %v3209
        %v3255 = vmul.f32 %v3003, %v3214
        %v3256 = vmul.f32 %v3004, %v3219
        %v3257 = vadd.f32 %v3221, %v3222
        %v3258 = vadd.f32 %v3257, %v3223
        %v3259 = vadd.f32 %v3258, %v3224
        %v3260 = vadd.f32 %v3259, %v3225
        %v3261 = vadd.f32 %v3260, %v3226
        %v3262 = vadd.f32 %v3261, %v3227
        %v3263 = vadd.f32 %v3262, %v3228
        %v3264 = vadd.f32 %v3263, %v3229
        %v3265 = vadd.f32 %v3264, %v3230
        %v3266 = vadd.f32 %v3265, %v3231
        %v3267 = vadd.f32 %v3266, %v3232
        %v3268 = vadd.f32 %v3267, %v3233
        %v3269 = vadd.f32 %v3268, %v3234
        %v3270 = vadd.f32 %v3269, %v3235
        %v3271 = vadd.f32 %v3270, %v3236
        %v3272 = vadd.f32 %v3271, %v3237
        %v3273 = vadd.f32 %v3272, %v3238
        %v3274 = vadd.f32 %v3273, %v3239
        %v3275 = vadd.f32 %v3274, %v3240
        %v3276 = vadd.f32 %v3275, %v3241
        %v3277 = vadd.f32 %v3276, %v3242
        %v3278 = vadd.f32 %v3277, %v3243
        %v3279 = vadd.f32 %v3278, %v3244
        %v3280 = vadd.f32 %v3279, %v3245
        %v3281 = vadd.f32 %v3280, %v3246
        %v3282 = vadd.f32 %v3281, %v3247
        %v3283 = vadd.f32 %v3282, %v3248
        %v3284 = vadd.f32 %v3283, %v3249
        %v3285 = vadd.f32 %v3284, %v3250
        %v3286 = vadd.f32 %v3285, %v3251
        %v3287 = vadd.f32 %v3286, %v3252
        %v3288 = vadd.f32 %v3287, %v3253
        %v3289 = vadd.f32 %v3288, %v3254
        %v3290 = vadd.f32 %v3289, %v3255
        %v3291 = vadd.f32 %v3290, %v3256
        %v3292 = vrot.slane %v3291, 4
        %v3293 = vadd.f32 %v3291, %v3292
        %v3294 = vrot.slane %v3293, 2
        %v3295 = vadd.f32 %v3293, %v3294
        %v3296 = vrot.slane %v3295, 1
        %v3297 = vadd.f32 %v3295, %v3296
        %v3298 = vpack.c.bf16 %v3297, %v3297
        %v3299 = vld [vmem:[%s3] sm:$0xf]
        %v3300 = vld [vmem:[%s3 + $0x4] sm:$0xf]
        %v3301 = vld [vmem:[%s3 + $0x8] sm:$0xf]
        %v3302 = vld [vmem:[%s3 + $0xc] sm:$0xf]
        %v3303 = vld [vmem:[%s3 + $0x10] sm:$0xf]
        %v3304 = vld [vmem:[%s3 + $0x14] sm:$0xf]
        %v3305 = vld [vmem:[%s3 + $0x18] sm:$0xf]
        %v3306 = vld [vmem:[%s3 + $0x1c] sm:$0xf]
        %v3307 = vld [vmem:[%s3 + $0x20] sm:$0xf]
        %v3308 = vld [vmem:[%s3 + $0x24] sm:$0xf]
        %v3309 = vld [vmem:[%s3 + $0x28] sm:$0xf]
        %v3310 = vld [vmem:[%s3 + $0x2c] sm:$0xf]
        %v3311 = vld [vmem:[%s3 + $0x30] sm:$0xf]
        %v3312 = vld [vmem:[%s3 + $0x34] sm:$0xf]
        %v3313 = vld [vmem:[%s3 + $0x38] sm:$0xf]
        %v3314 = vld [vmem:[%s3 + $0x3c] sm:$0xf]
        %v3315 = vld [vmem:[%s4] sm:$0x1]
        %v3332 = vunpack.c.l.b16 %v3299
        %v3333 = vunpack.c.l.b16 %v3300
        %v3334 = vunpack.c.l.b16 %v3301
        %v3335 = vunpack.c.l.b16 %v3302
        %v3336 = vunpack.c.l.b16 %v3303
        %v3337 = vunpack.c.l.b16 %v3304
        %v3338 = vunpack.c.l.b16 %v3305
        %v3339 = vunpack.c.l.b16 %v3306
        %v3340 = vunpack.c.l.b16 %v3307
        %v3341 = vunpack.c.l.b16 %v3308
        %v3342 = vunpack.c.l.b16 %v3309
        %v3343 = vunpack.c.l.b16 %v3310
        %v3344 = vunpack.c.l.b16 %v3311
        %v3345 = vunpack.c.l.b16 %v3312
        %v3346 = vunpack.c.l.b16 %v3313
        %v3347 = vunpack.c.l.b16 %v3314
        %v3348 = vpack.c.b16 %v3333, %v3332
        %v3349 = vpack.c.b16 %v3335, %v3334
        %v3350 = vpack.c.b16 %v3337, %v3336
        %v3351 = vpack.c.b16 %v3339, %v3338
        %v3352 = vpack.c.b16 %v3341, %v3340
        %v3353 = vpack.c.b16 %v3343, %v3342
        %v3354 = vpack.c.b16 %v3345, %v3344
        %v3355 = vpack.c.b16 %v3347, %v3346
        %3364 = vmatpush.bf16.msra.mxu0 %v3355
        %3365 = vmatpush.bf16.msra.mxu0 %v3354
        %3366 = vmatpush.bf16.msra.mxu0 %v3353
        %3367 = vmatpush.bf16.msra.mxu0 %v3352
        %3368 = vmatpush.bf16.msra.mxu0 %v3351
        %3369 = vmatpush.bf16.msra.mxu0 %v3350
        %3370 = vmatpush.bf16.msra.mxu0 %v3349
        %3371 = vmatpush.bf16.msra.mxu0 %v3348
        %3372 = vmatmul.bf16.gmra.mxu0 %v3298
        %v3373 = vpop.f32.mrf.mxu0
        %v3374 = vadd.f32 %v3315, %v3373
        %v3375 = vpop.f32.mrf.mxu0
        %3376 = vdwg.mxu0
        %v3377 = vxor.u32 %v3374, 2147483648
        %v3378 = vmul.f32 %v3377, 1.442695
        %v3379 = vpow.pop %v3378
        %v3380 = vadd.f32 %v3379, 1.0
        %v3381 = vrcp.pop %v3380
        %v3382 = vmul.f32 %v3380, %v3381
        %v3383 = vsub.f32 1.0, %v3382
        %v3384 = vmul.f32 %v3381, %v3383
        %v3385 = vadd.f32 %v3381, %v3384
        %vm3386 = vweird.f32 %v3380
        %vm3387 = vweird.f32 %v3381
        %vm3388 = vmor %vm3386, %vm3387
        %v3389 = vsel %vm3388, %v3381, %v3385
        %v3390 = vand.u32 2147483647, %v3380
        %vm3391 = vcmp.eq.f32.partialorder %v3390, 8.507059e+37
        %v3392 = vand.u32 %v3380, 2147483648
        %v3393 = vor.u32 1.1754944e-38, %v3392
        %v3394 = vsel %vm3391, %v3393, %v3389
        %v3395 = vmul.f32 1.0, %v3394
        %3396 = vst [vmem:[%s216] sm:$0x1] %v3395
        %s3397 = sand.u32 %s137, 1
        %s3398 = scalar_lea.sflag [#allocation3], %s3397
        %s3399 = sand.u32 %s137, 1
        %s3400 = scalar_lea.vmem [#allocation2], %s3399
        // Predicated region
        $region41: #{tpu_custom_call.1} parent=39 // pred_check
          %p3401 = pneg %p147
        $region42: #{tpu_custom_call.1} parent=39 // pred_check_branch
          %3403 = sbr.rel (%p3401) target = $region44
        $region43: #{tpu_custom_call.1} parent=39 // pred_region
          %3405 = vsyncadd %s3398, 0
          %s3406 = scalar_lea.hbm %s5, %s19
          %s3408 = sshll.u32 %s3400, 4
          %s3409 = int_to_ptr.vmem [resolvable:$true] %s3408
          %s3410 = sshll.u32 %s3406, 4
          %s3411 = int_to_ptr.hbm [resolvable:$true] %s3410
          %3413 = dma.vmem_to_hbm [thread:$0]  %s3409, 16, %s3411, %s3398
        $region44: #{tpu_custom_call.1} parent=39 // pred_fallthru
          _
      $region40: #{tpu_custom_call.1} parent=5 // pred_fallthru
        _
      %p3414 = scmp.le.s32.totalorder 2, %s14
      // Predicated region
      $region45: #{tpu_custom_call.1} parent=5 // pred_check
        %p3415 = pneg %p3414
      $region46: #{tpu_custom_call.1} parent=5 // pred_check_branch
        %3417 = sbr.rel (%p3415) target = $region48
      $region47: #{tpu_custom_call.1} parent=5 // pred_region
        %s3418 = ssub.s32 %s14, 2
        // Predicated region
        $region49: #{tpu_custom_call.1} parent=47 // pred_check
          %p3419 = pneg %p153
        $region50: #{tpu_custom_call.1} parent=47 // pred_check_branch
          %3421 = sbr.rel (%p3419) target = $region52
        $region51: #{tpu_custom_call.1} parent=47 // pred_region
          %s3422 = sand.u32 %s138, 1
          %s3423 = scalar_lea.sflag [#allocation3], %s3422
          %s3424 = sand.u32 %s138, 1
          %s3425 = scalar_lea.vmem [#allocation2], %s3424
          %3427 = dma.done %s3423, 16
        $region52: #{tpu_custom_call.1} parent=47 // pred_fallthru
          _
      $region48: #{tpu_custom_call.1} parent=5 // pred_fallthru
        _
    $region6: #{tpu_custom_call.1} parent=1 // loop_footer
      %s18 = sadd.s32 1, %s14
    $region7: #{tpu_custom_call.1} parent=1 // loop_footer_branch
      %13 = sbr.rel target = $region3
    $region8: #{tpu_custom_call.1} parent=1 // loop_exit
      _
    %3428 = vsyncpa [#allocation3], 1
    %s3429 = scalar_lea.sflag [#allocation3], 1
    %3430 = vsyncpa %s3429, 1

</llo_original>
